<compile_context>
chip_gen: v5e
topology: v5e:2x2
jax: 0.10.0
libtpu: 0.0.40
codegen_flags: <defaults>
</compile_context>

<pallas_src>
import functools

import jax
import jax.numpy as jnp
from jax import lax
from jax.experimental import pallas as pl
from jax.experimental.pallas import tpu as pltpu

_LEFT = 8  # left pad inside the scratch so the interior store is sublane-aligned


def _stage_padded(dst_ref, val, *, NB, H, W, C):
    """Write `val` (NB,H,W,C) into dst_ref with a zero halo around it.

    dst_ref: (NB, H+2, W+16, C); data lives at rows 1..H, cols 8..8+W-1.
    Halo strips are re-zeroed every step (aligned stores) so correctness does
    not depend on which core ran grid step 0.
    """
    dt = dst_ref.dtype
    HP = H + 2
    # left / right 8-wide strips (cover halo columns 7 and 8+W for all rows)
    dst_ref[:, :, 0:_LEFT, :] = jnp.zeros((NB, HP, _LEFT, C), dt)
    dst_ref[:, :, _LEFT + W:_LEFT + W + 8, :] = jnp.zeros((NB, HP, 8, C), dt)
    # top / bottom halo rows over the interior columns
    dst_ref[:, 0:1, _LEFT:_LEFT + W, :] = jnp.zeros((NB, 1, W, C), dt)
    dst_ref[:, H + 1:H + 2, _LEFT:_LEFT + W, :] = jnp.zeros((NB, 1, W, C), dt)
    # interior (sublane-aligned: starts at W-offset 8)
    dst_ref[:, 1:H + 1, _LEFT:_LEFT + W, :] = val.astype(dt)


def _conv3x3(src_ref, w_ref, *, NB, H, W, Cin, Cout):
    """3x3 'SAME' conv from a padded VMEM scratch.

    src_ref: (NB, H+2, W+16, Cin) zero-padded input.
    w_ref  : (3, 3*Cin, Cout), row index = kw*Cin + cin, leading index = kh.
    Returns f32 accumulator of shape (NB*H*W, Cout).
    """
    f32 = jnp.float32
    M = NB * H * W
    # One window load per kw tap (3 loads total), fused along channels -> K=3*Cin.
    cols = [src_ref[:, :, _LEFT - 1 + kw:_LEFT - 1 + kw + W, :] for kw in range(3)]
    big = jnp.concatenate(cols, axis=-1)          # (NB, H+2, W, 3*Cin)
    acc = jnp.zeros((M, Cout), f32)
    for kh in range(3):                            # kh windows: free outer-dim slices
        patch = big[:, kh:kh + H, :, :].reshape(M, 3 * Cin)
        acc = acc + jnp.dot(patch, w_ref[kh], preferred_element_type=f32)
    return acc


def _basic_block_kernel(x_ref, w1_ref, s1_ref, b1_ref, w2_ref, s2_ref, b2_ref,
                        o_ref, xpad_ref, mid_ref, *, NB, H, W, C):
    """One grid step == NB batch elements.

    x_ref  : (NB, H, W, C)      input block (also the residual)
    w*_ref : (3, 3*C, C)        conv weights, kw-fused along the K axis
    s*/b*  : (1, C)             folded (inference-mode) BN scale / bias
    o_ref  : (NB, H, W, C)
    xpad_ref, mid_ref : (NB, H+2, W+16, C) VMEM scratch (padded staging)
    """
    f32 = jnp.float32
    M = NB * H * W

    xv = x_ref[...]                                   # single load, reused for residual

    # ---- conv1 (3x3, stride 1, pad 1, no bias) ----
    _stage_padded(xpad_ref, xv, NB=NB, H=H, W=W, C=C)
    acc1 = _conv3x3(xpad_ref, w1_ref, NB=NB, H=H, W=W, Cin=C, Cout=C)

    # ---- bn1 + relu ----
    out1 = jnp.maximum(acc1 * s1_ref[...] + b1_ref[...], 0.0)

    # ---- conv2 (3x3, stride 1, pad 1, no bias) ----
    _stage_padded(mid_ref, out1.reshape(NB, H, W, C), NB=NB, H=H, W=W, C=C)
    acc2 = _conv3x3(mid_ref, w2_ref, NB=NB, H=H, W=W, Cin=C, Cout=C)

    # ---- bn2 + residual add + relu ----
    out2 = acc2 * s2_ref[...] + b2_ref[...]
    res = xv.astype(f32).reshape(M, C)
    out = jnp.maximum(out2 + res, 0.0)
    o_ref[...] = out.reshape(NB, H, W, C).astype(o_ref.dtype)


def basic_block(x, w1, s1, b1, w2, s2, b2, *, batch_block=None):
    """x: (N,H,W,C) NHWC.  w*: (3,3,C,C) HWIO.  s*/b*: (C,) folded BN scale/bias."""
    N, H, W, C = x.shape
    assert w1.shape == (3, 3, C, C) and w2.shape == (3, 3, C, C), \
        "downsample=None requires inplanes == planes"
    NB = batch_block if batch_block is not None else (2 if N % 2 == 0 else 1)
    assert N % NB == 0
    HP, WP = H + 2, W + 16   # 8-col aligned left pad + W + 8-col right halo strip

    # (kh, kw, cin, cout) -> (kh, kw*C + cin, cout): K axis fuses the 3 kw taps.
    w1r = w1.reshape(3, 3 * C, C)
    w2r = w2.reshape(3, 3 * C, C)
    s1r, b1r = s1.reshape(1, C), b1.reshape(1, C)
    s2r, b2r = s2.reshape(1, C), b2.reshape(1, C)

    kernel = functools.partial(_basic_block_kernel, NB=NB, H=H, W=W, C=C)

    return pl.pallas_call(
        kernel,
        out_shape=jax.ShapeDtypeStruct((N, H, W, C), x.dtype),
        grid_spec=pltpu.PrefetchScalarGridSpec(
            num_scalar_prefetch=0,
            grid=(N // NB,),
            in_specs=[
                pl.BlockSpec((NB, H, W, C), lambda n: (n, 0, 0, 0)),
                pl.BlockSpec((3, 3 * C, C), lambda n: (0, 0, 0)),
                pl.BlockSpec((1, C), lambda n: (0, 0)),
                pl.BlockSpec((1, C), lambda n: (0, 0)),
                pl.BlockSpec((3, 3 * C, C), lambda n: (0, 0, 0)),
                pl.BlockSpec((1, C), lambda n: (0, 0)),
                pl.BlockSpec((1, C), lambda n: (0, 0)),
            ],
            out_specs=pl.BlockSpec((NB, H, W, C), lambda n: (n, 0, 0, 0)),
            scratch_shapes=[
                pltpu.VMEM((NB, HP, WP, C), x.dtype),   # padded input staging
                pltpu.VMEM((NB, HP, WP, C), x.dtype),   # padded conv1 output staging
            ],
        ),
        compiler_params=pltpu.CompilerParams(
            dimension_semantics=("parallel",),          # both TCs get work on v7x
            vmem_limit_bytes=32 * 1024 * 1024,          # explicit, plenty of headroom
        ),
    )(x, w1r, s1r, b1r, w2r, s2r, b2r)


def basic_block_ref(x, w1, s1, b1, w2, s2, b2):
    """Pure-JAX reference (NHWC / HWIO), inference-mode BN folded."""
    dn = ("NHWC", "HWIO", "NHWC")
    hp = lax.Precision.HIGHEST
    out = lax.conv_general_dilated(x, w1, (1, 1), "SAME",
                                   dimension_numbers=dn, precision=hp)
    out = jnp.maximum(out * s1 + b1, 0.0)
    out = lax.conv_general_dilated(out, w2, (1, 1), "SAME",
                                   dimension_numbers=dn, precision=hp)
    out = out * s2 + b2
    return jnp.maximum(out + x, 0.0)


if __name__ == "__main__":
    # Small but lane-dense shapes: C=128 fills the 128-lane vregs / MXU,
    # NB=2 batch blocking -> matmul M = 2*8*8 = 128, grid = (2,) "parallel".
    N, H, W, C = 4, 8, 8, 128

    key = jax.random.PRNGKey(0)
    k = jax.random.split(key, 11)
    x = jax.random.normal(k[0], (N, H, W, C), jnp.float32)

    fan_in = 3 * 3 * C
    w1 = jax.random.normal(k[1], (3, 3, C, C), jnp.float32) * (2.0 / fan_in) ** 0.5
    w2 = jax.random.normal(k[2], (3, 3, C, C), jnp.float32) * (2.0 / fan_in) ** 0.5

    # BatchNorm params (inference mode), folded into per-channel scale/bias.
    eps = 1e-5
    gamma1 = 1.0 + 0.1 * jax.random.normal(k[3], (C,), jnp.float32)
    beta1 = 0.1 * jax.random.normal(k[4], (C,), jnp.float32)
    mean1 = 0.1 * jax.random.normal(k[5], (C,), jnp.float32)
    var1 = jnp.abs(jax.random.normal(k[6], (C,), jnp.float32)) + 0.5
    gamma2 = 1.0 + 0.1 * jax.random.normal(k[7], (C,), jnp.float32)
    beta2 = 0.1 * jax.random.normal(k[8], (C,), jnp.float32)
    mean2 = 0.1 * jax.random.normal(k[9], (C,), jnp.float32)
    var2 = jnp.abs(jax.random.normal(k[10], (C,), jnp.float32)) + 0.5

    s1 = gamma1 / jnp.sqrt(var1 + eps)
    b1 = beta1 - mean1 * s1
    s2 = gamma2 / jnp.sqrt(var2 + eps)
    b2 = beta2 - mean2 * s2

    out = basic_block(x, w1, s1, b1, w2, s2, b2)
    out = jax.block_until_ready(out)

    ref = basic_block_ref(x, w1, s1, b1, w2, s2, b2)
    assert out.shape == (N, H, W, C)
    err = jnp.max(jnp.abs(out - ref))
    assert jnp.allclose(out, ref, rtol=1e-3, atol=1e-3), f"max err {err}"

    print("KERNEL_OK")
</pallas_src>

<mosaic_0001>
module attributes {stable_mosaic.version = 11 : i64} {
  func.func @_basic_block_kernel(%arg0: i32, %arg1: memref<2x8x8x128xf32, #tpu.memory_space<vmem>>, %arg2: memref<3x384x128xf32, #tpu.memory_space<vmem>>, %arg3: memref<1x128xf32, #tpu.memory_space<vmem>>, %arg4: memref<1x128xf32, #tpu.memory_space<vmem>>, %arg5: memref<3x384x128xf32, #tpu.memory_space<vmem>>, %arg6: memref<1x128xf32, #tpu.memory_space<vmem>>, %arg7: memref<1x128xf32, #tpu.memory_space<vmem>>, %arg8: memref<2x8x8x128xf32, #tpu.memory_space<vmem>>, %arg9: memref<2x10x24x128xf32, #tpu.memory_space<vmem>>, %arg10: memref<2x10x24x128xf32, #tpu.memory_space<vmem>>) attributes {dimension_semantics = [#tpu.dimension_semantics<parallel>], iteration_bounds = array<i64: 2>, scalar_prefetch = 0 : i64, scratch_operands = 2 : i64, tpu.core_type = #tpu.core_type<tc>, window_params = [{transform_indices = @transform_0, window_bounds = array<i64: 2, 8, 8, 128>}, {pipeline_mode = #tpu.pipeline_mode<synchronous>, transform_indices = @transform_1, window_bounds = array<i64: 3, 384, 128>}, {pipeline_mode = #tpu.pipeline_mode<synchronous>, transform_indices = @transform_2, window_bounds = array<i64: 1, 128>}, {pipeline_mode = #tpu.pipeline_mode<synchronous>, transform_indices = @transform_3, window_bounds = array<i64: 1, 128>}, {pipeline_mode = #tpu.pipeline_mode<synchronous>, transform_indices = @transform_4, window_bounds = array<i64: 3, 384, 128>}, {pipeline_mode = #tpu.pipeline_mode<synchronous>, transform_indices = @transform_5, window_bounds = array<i64: 1, 128>}, {pipeline_mode = #tpu.pipeline_mode<synchronous>, transform_indices = @transform_6, window_bounds = array<i64: 1, 128>}, {transform_indices = @transform_7, window_bounds = array<i64: 2, 8, 8, 128>}]} {
    %c0 = arith.constant 0 : index
    %c0_0 = arith.constant 0 : index
    %c0_1 = arith.constant 0 : index
    %c0_2 = arith.constant 0 : index
    %0 = vector.load %arg1[%c0, %c0_0, %c0_1, %c0_2] : memref<2x8x8x128xf32, #tpu.memory_space<vmem>>, vector<2x8x8x128xf32>
    %cst = arith.constant 0.000000e+00 : f32
    %1 = vector.broadcast %cst : f32 to vector<2x10x8x128xf32>
    %c0_3 = arith.constant 0 : index
    %c0_4 = arith.constant 0 : index
    %c0_5 = arith.constant 0 : index
    %c0_6 = arith.constant 0 : index
    %2 = vector.load %arg9[%c0_3, %c0_4, %c0_5, %c0_6] : memref<2x10x24x128xf32, #tpu.memory_space<vmem>>, vector<2x10x8x128xf32>
    tpu.vector_store %arg9[%c0_3, %c0_4, %c0_5, %c0_6], %1 {strides = array<i32>} : memref<2x10x24x128xf32, #tpu.memory_space<vmem>>, vector<2x10x8x128xf32>,
    %cst_7 = arith.constant 0.000000e+00 : f32
    %3 = vector.broadcast %cst_7 : f32 to vector<2x10x8x128xf32>
    %c0_8 = arith.constant 0 : index
    %c0_9 = arith.constant 0 : index
    %c16 = arith.constant 16 : index
    %c0_10 = arith.constant 0 : index
    %4 = vector.load %arg9[%c0_8, %c0_9, %c16, %c0_10] : memref<2x10x24x128xf32, #tpu.memory_space<vmem>>, vector<2x10x8x128xf32>
    tpu.vector_store %arg9[%c0_8, %c0_9, %c16, %c0_10], %3 {strides = array<i32>} : memref<2x10x24x128xf32, #tpu.memory_space<vmem>>, vector<2x10x8x128xf32>,
    %cst_11 = arith.constant 0.000000e+00 : f32
    %5 = vector.broadcast %cst_11 : f32 to vector<2x1x8x128xf32>
    %c0_12 = arith.constant 0 : index
    %c0_13 = arith.constant 0 : index
    %c8 = arith.constant 8 : index
    %c0_14 = arith.constant 0 : index
    %6 = vector.load %arg9[%c0_12, %c0_13, %c8, %c0_14] : memref<2x10x24x128xf32, #tpu.memory_space<vmem>>, vector<2x1x8x128xf32>
    tpu.vector_store %arg9[%c0_12, %c0_13, %c8, %c0_14], %5 {strides = array<i32>} : memref<2x10x24x128xf32, #tpu.memory_space<vmem>>, vector<2x1x8x128xf32>,
    %cst_15 = arith.constant 0.000000e+00 : f32
    %7 = vector.broadcast %cst_15 : f32 to vector<2x1x8x128xf32>
    %c0_16 = arith.constant 0 : index
    %c9 = arith.constant 9 : index
    %c8_17 = arith.constant 8 : index
    %c0_18 = arith.constant 0 : index
    %8 = vector.load %arg9[%c0_16, %c9, %c8_17, %c0_18] : memref<2x10x24x128xf32, #tpu.memory_space<vmem>>, vector<2x1x8x128xf32>
    tpu.vector_store %arg9[%c0_16, %c9, %c8_17, %c0_18], %7 {strides = array<i32>} : memref<2x10x24x128xf32, #tpu.memory_space<vmem>>, vector<2x1x8x128xf32>,
    %c0_19 = arith.constant 0 : index
    %c1 = arith.constant 1 : index
    %c8_20 = arith.constant 8 : index
    %c0_21 = arith.constant 0 : index
    %9 = vector.load %arg9[%c0_19, %c1, %c8_20, %c0_21] : memref<2x10x24x128xf32, #tpu.memory_space<vmem>>, vector<2x8x8x128xf32>
    tpu.vector_store %arg9[%c0_19, %c1, %c8_20, %c0_21], %0 {strides = array<i32>} : memref<2x10x24x128xf32, #tpu.memory_space<vmem>>, vector<2x8x8x128xf32>,
    %c0_22 = arith.constant 0 : index
    %c0_23 = arith.constant 0 : index
    %c7 = arith.constant 7 : index
    %c0_24 = arith.constant 0 : index
    %10 = vector.load %arg9[%c0_22, %c0_23, %c7, %c0_24] : memref<2x10x24x128xf32, #tpu.memory_space<vmem>>, vector<2x10x8x128xf32>
    %c0_25 = arith.constant 0 : index
    %c0_26 = arith.constant 0 : index
    %c8_27 = arith.constant 8 : index
    %c0_28 = arith.constant 0 : index
    %11 = vector.load %arg9[%c0_25, %c0_26, %c8_27, %c0_28] : memref<2x10x24x128xf32, #tpu.memory_space<vmem>>, vector<2x10x8x128xf32>
    %c0_29 = arith.constant 0 : index
    %c0_30 = arith.constant 0 : index
    %c9_31 = arith.constant 9 : index
    %c0_32 = arith.constant 0 : index
    %12 = vector.load %arg9[%c0_29, %c0_30, %c9_31, %c0_32] : memref<2x10x24x128xf32, #tpu.memory_space<vmem>>, vector<2x10x8x128xf32>
    %13 = tpu.concatenate %10, %11, %12 in 3 : vector<2x10x8x128xf32>, vector<2x10x8x128xf32>, vector<2x10x8x128xf32> -> vector<2x10x8x384xf32>
    %cst_33 = arith.constant 0.000000e+00 : f32
    %14 = vector.broadcast %cst_33 : f32 to vector<128x128xf32>
    %15 = vector.extract_strided_slice %13 {offsets = [0, 0, 0, 0], sizes = [2, 8, 8, 384], strides = [1, 1, 1, 1]} : vector<2x10x8x384xf32> to vector<2x8x8x384xf32>
    %16 = vector.shape_cast %15 : vector<2x8x8x384xf32> to vector<128x384xf32>
    %c0_34 = arith.constant 0 : index
    %c0_35 = arith.constant 0 : index
    %c0_36 = arith.constant 0 : index
    %17 = vector.load %arg2[%c0_34, %c0_35, %c0_36] : memref<3x384x128xf32, #tpu.memory_space<vmem>>, vector<1x384x128xf32>
    %18 = vector.shape_cast %17 : vector<1x384x128xf32> to vector<384x128xf32>
    %cst_37 = arith.constant dense<0.000000e+00> : vector<128x128xf32>
    %19 = tpu.matmul %16, %18, %cst_37 {dimension_numbers = #tpu.dot_dimension_numbers<[1], [0], [0], [1], [0, 0, 1, 1], [], []>} : vector<128x384xf32>, vector<384x128xf32>, vector<128x128xf32> -> vector<128x128xf32>
    %20 = arith.addf %14, %19 : vector<128x128xf32>
    %21 = vector.extract_strided_slice %13 {offsets = [0, 1, 0, 0], sizes = [2, 8, 8, 384], strides = [1, 1, 1, 1]} : vector<2x10x8x384xf32> to vector<2x8x8x384xf32>
    %22 = vector.shape_cast %21 : vector<2x8x8x384xf32> to vector<128x384xf32>
    %c1_38 = arith.constant 1 : index
    %c0_39 = arith.constant 0 : index
    %c0_40 = arith.constant 0 : index
    %23 = vector.load %arg2[%c1_38, %c0_39, %c0_40] : memref<3x384x128xf32, #tpu.memory_space<vmem>>, vector<1x384x128xf32>
    %24 = vector.shape_cast %23 : vector<1x384x128xf32> to vector<384x128xf32>
    %cst_41 = arith.constant dense<0.000000e+00> : vector<128x128xf32>
    %25 = tpu.matmul %22, %24, %cst_41 {dimension_numbers = #tpu.dot_dimension_numbers<[1], [0], [0], [1], [0, 0, 1, 1], [], []>} : vector<128x384xf32>, vector<384x128xf32>, vector<128x128xf32> -> vector<128x128xf32>
    %26 = arith.addf %20, %25 : vector<128x128xf32>
    %27 = vector.extract_strided_slice %13 {offsets = [0, 2, 0, 0], sizes = [2, 8, 8, 384], strides = [1, 1, 1, 1]} : vector<2x10x8x384xf32> to vector<2x8x8x384xf32>
    %28 = vector.shape_cast %27 : vector<2x8x8x384xf32> to vector<128x384xf32>
    %c2 = arith.constant 2 : index
    %c0_42 = arith.constant 0 : index
    %c0_43 = arith.constant 0 : index
    %29 = vector.load %arg2[%c2, %c0_42, %c0_43] : memref<3x384x128xf32, #tpu.memory_space<vmem>>, vector<1x384x128xf32>
    %30 = vector.shape_cast %29 : vector<1x384x128xf32> to vector<384x128xf32>
    %cst_44 = arith.constant dense<0.000000e+00> : vector<128x128xf32>
    %31 = tpu.matmul %28, %30, %cst_44 {dimension_numbers = #tpu.dot_dimension_numbers<[1], [0], [0], [1], [0, 0, 1, 1], [], []>} : vector<128x384xf32>, vector<384x128xf32>, vector<128x128xf32> -> vector<128x128xf32>
    %32 = arith.addf %26, %31 : vector<128x128xf32>
    %c0_45 = arith.constant 0 : index
    %c0_46 = arith.constant 0 : index
    %33 = vector.load %arg3[%c0_45, %c0_46] : memref<1x128xf32, #tpu.memory_space<vmem>>, vector<1x128xf32>
    %34 = vector.broadcast %33 : vector<1x128xf32> to vector<128x128xf32>
    %35 = arith.mulf %32, %34 : vector<128x128xf32>
    %c0_47 = arith.constant 0 : index
    %c0_48 = arith.constant 0 : index
    %36 = vector.load %arg4[%c0_47, %c0_48] : memref<1x128xf32, #tpu.memory_space<vmem>>, vector<1x128xf32>
    %37 = vector.broadcast %36 : vector<1x128xf32> to vector<128x128xf32>
    %38 = arith.addf %35, %37 : vector<128x128xf32>
    %cst_49 = arith.constant 0.000000e+00 : f32
    %39 = vector.broadcast %cst_49 : f32 to vector<128x128xf32>
    %40 = arith.maximumf %38, %39 : vector<128x128xf32>
    %41 = vector.shape_cast %40 : vector<128x128xf32> to vector<2x8x8x128xf32>
    %cst_50 = arith.constant 0.000000e+00 : f32
    %42 = vector.broadcast %cst_50 : f32 to vector<2x10x8x128xf32>
    %c0_51 = arith.constant 0 : index
    %c0_52 = arith.constant 0 : index
    %c0_53 = arith.constant 0 : index
    %c0_54 = arith.constant 0 : index
    %43 = vector.load %arg10[%c0_51, %c0_52, %c0_53, %c0_54] : memref<2x10x24x128xf32, #tpu.memory_space<vmem>>, vector<2x10x8x128xf32>
    tpu.vector_store %arg10[%c0_51, %c0_52, %c0_53, %c0_54], %42 {strides = array<i32>} : memref<2x10x24x128xf32, #tpu.memory_space<vmem>>, vector<2x10x8x128xf32>,
    %cst_55 = arith.constant 0.000000e+00 : f32
    %44 = vector.broadcast %cst_55 : f32 to vector<2x10x8x128xf32>
    %c0_56 = arith.constant 0 : index
    %c0_57 = arith.constant 0 : index
    %c16_58 = arith.constant 16 : index
    %c0_59 = arith.constant 0 : index
    %45 = vector.load %arg10[%c0_56, %c0_57, %c16_58, %c0_59] : memref<2x10x24x128xf32, #tpu.memory_space<vmem>>, vector<2x10x8x128xf32>
    tpu.vector_store %arg10[%c0_56, %c0_57, %c16_58, %c0_59], %44 {strides = array<i32>} : memref<2x10x24x128xf32, #tpu.memory_space<vmem>>, vector<2x10x8x128xf32>,
    %cst_60 = arith.constant 0.000000e+00 : f32
    %46 = vector.broadcast %cst_60 : f32 to vector<2x1x8x128xf32>
    %c0_61 = arith.constant 0 : index
    %c0_62 = arith.constant 0 : index
    %c8_63 = arith.constant 8 : index
    %c0_64 = arith.constant 0 : index
    %47 = vector.load %arg10[%c0_61, %c0_62, %c8_63, %c0_64] : memref<2x10x24x128xf32, #tpu.memory_space<vmem>>, vector<2x1x8x128xf32>
    tpu.vector_store %arg10[%c0_61, %c0_62, %c8_63, %c0_64], %46 {strides = array<i32>} : memref<2x10x24x128xf32, #tpu.memory_space<vmem>>, vector<2x1x8x128xf32>,
    %cst_65 = arith.constant 0.000000e+00 : f32
    %48 = vector.broadcast %cst_65 : f32 to vector<2x1x8x128xf32>
    %c0_66 = arith.constant 0 : index
    %c9_67 = arith.constant 9 : index
    %c8_68 = arith.constant 8 : index
    %c0_69 = arith.constant 0 : index
    %49 = vector.load %arg10[%c0_66, %c9_67, %c8_68, %c0_69] : memref<2x10x24x128xf32, #tpu.memory_space<vmem>>, vector<2x1x8x128xf32>
    tpu.vector_store %arg10[%c0_66, %c9_67, %c8_68, %c0_69], %48 {strides = array<i32>} : memref<2x10x24x128xf32, #tpu.memory_space<vmem>>, vector<2x1x8x128xf32>,
    %c0_70 = arith.constant 0 : index
    %c1_71 = arith.constant 1 : index
    %c8_72 = arith.constant 8 : index
    %c0_73 = arith.constant 0 : index
    %50 = vector.load %arg10[%c0_70, %c1_71, %c8_72, %c0_73] : memref<2x10x24x128xf32, #tpu.memory_space<vmem>>, vector<2x8x8x128xf32>
    tpu.vector_store %arg10[%c0_70, %c1_71, %c8_72, %c0_73], %41 {strides = array<i32>} : memref<2x10x24x128xf32, #tpu.memory_space<vmem>>, vector<2x8x8x128xf32>,
    %c0_74 = arith.constant 0 : index
    %c0_75 = arith.constant 0 : index
    %c7_76 = arith.constant 7 : index
    %c0_77 = arith.constant 0 : index
    %51 = vector.load %arg10[%c0_74, %c0_75, %c7_76, %c0_77] : memref<2x10x24x128xf32, #tpu.memory_space<vmem>>, vector<2x10x8x128xf32>
    %c0_78 = arith.constant 0 : index
    %c0_79 = arith.constant 0 : index
    %c8_80 = arith.constant 8 : index
    %c0_81 = arith.constant 0 : index
    %52 = vector.load %arg10[%c0_78, %c0_79, %c8_80, %c0_81] : memref<2x10x24x128xf32, #tpu.memory_space<vmem>>, vector<2x10x8x128xf32>
    %c0_82 = arith.constant 0 : index
    %c0_83 = arith.constant 0 : index
    %c9_84 = arith.constant 9 : index
    %c0_85 = arith.constant 0 : index
    %53 = vector.load %arg10[%c0_82, %c0_83, %c9_84, %c0_85] : memref<2x10x24x128xf32, #tpu.memory_space<vmem>>, vector<2x10x8x128xf32>
    %54 = tpu.concatenate %51, %52, %53 in 3 : vector<2x10x8x128xf32>, vector<2x10x8x128xf32>, vector<2x10x8x128xf32> -> vector<2x10x8x384xf32>
    %cst_86 = arith.constant 0.000000e+00 : f32
    %55 = vector.broadcast %cst_86 : f32 to vector<128x128xf32>
    %56 = vector.extract_strided_slice %54 {offsets = [0, 0, 0, 0], sizes = [2, 8, 8, 384], strides = [1, 1, 1, 1]} : vector<2x10x8x384xf32> to vector<2x8x8x384xf32>
    %57 = vector.shape_cast %56 : vector<2x8x8x384xf32> to vector<128x384xf32>
    %c0_87 = arith.constant 0 : index
    %c0_88 = arith.constant 0 : index
    %c0_89 = arith.constant 0 : index
    %58 = vector.load %arg5[%c0_87, %c0_88, %c0_89] : memref<3x384x128xf32, #tpu.memory_space<vmem>>, vector<1x384x128xf32>
    %59 = vector.shape_cast %58 : vector<1x384x128xf32> to vector<384x128xf32>
    %cst_90 = arith.constant dense<0.000000e+00> : vector<128x128xf32>
    %60 = tpu.matmul %57, %59, %cst_90 {dimension_numbers = #tpu.dot_dimension_numbers<[1], [0], [0], [1], [0, 0, 1, 1], [], []>} : vector<128x384xf32>, vector<384x128xf32>, vector<128x128xf32> -> vector<128x128xf32>
    %61 = arith.addf %55, %60 : vector<128x128xf32>
    %62 = vector.extract_strided_slice %54 {offsets = [0, 1, 0, 0], sizes = [2, 8, 8, 384], strides = [1, 1, 1, 1]} : vector<2x10x8x384xf32> to vector<2x8x8x384xf32>
    %63 = vector.shape_cast %62 : vector<2x8x8x384xf32> to vector<128x384xf32>
    %c1_91 = arith.constant 1 : index
    %c0_92 = arith.constant 0 : index
    %c0_93 = arith.constant 0 : index
    %64 = vector.load %arg5[%c1_91, %c0_92, %c0_93] : memref<3x384x128xf32, #tpu.memory_space<vmem>>, vector<1x384x128xf32>
    %65 = vector.shape_cast %64 : vector<1x384x128xf32> to vector<384x128xf32>
    %cst_94 = arith.constant dense<0.000000e+00> : vector<128x128xf32>
    %66 = tpu.matmul %63, %65, %cst_94 {dimension_numbers = #tpu.dot_dimension_numbers<[1], [0], [0], [1], [0, 0, 1, 1], [], []>} : vector<128x384xf32>, vector<384x128xf32>, vector<128x128xf32> -> vector<128x128xf32>
    %67 = arith.addf %61, %66 : vector<128x128xf32>
    %68 = vector.extract_strided_slice %54 {offsets = [0, 2, 0, 0], sizes = [2, 8, 8, 384], strides = [1, 1, 1, 1]} : vector<2x10x8x384xf32> to vector<2x8x8x384xf32>
    %69 = vector.shape_cast %68 : vector<2x8x8x384xf32> to vector<128x384xf32>
    %c2_95 = arith.constant 2 : index
    %c0_96 = arith.constant 0 : index
    %c0_97 = arith.constant 0 : index
    %70 = vector.load %arg5[%c2_95, %c0_96, %c0_97] : memref<3x384x128xf32, #tpu.memory_space<vmem>>, vector<1x384x128xf32>
    %71 = vector.shape_cast %70 : vector<1x384x128xf32> to vector<384x128xf32>
    %cst_98 = arith.constant dense<0.000000e+00> : vector<128x128xf32>
    %72 = tpu.matmul %69, %71, %cst_98 {dimension_numbers = #tpu.dot_dimension_numbers<[1], [0], [0], [1], [0, 0, 1, 1], [], []>} : vector<128x384xf32>, vector<384x128xf32>, vector<128x128xf32> -> vector<128x128xf32>
    %73 = arith.addf %67, %72 : vector<128x128xf32>
    %c0_99 = arith.constant 0 : index
    %c0_100 = arith.constant 0 : index
    %74 = vector.load %arg6[%c0_99, %c0_100] : memref<1x128xf32, #tpu.memory_space<vmem>>, vector<1x128xf32>
    %75 = vector.broadcast %74 : vector<1x128xf32> to vector<128x128xf32>
    %76 = arith.mulf %73, %75 : vector<128x128xf32>
    %c0_101 = arith.constant 0 : index
    %c0_102 = arith.constant 0 : index
    %77 = vector.load %arg7[%c0_101, %c0_102] : memref<1x128xf32, #tpu.memory_space<vmem>>, vector<1x128xf32>
    %78 = vector.broadcast %77 : vector<1x128xf32> to vector<128x128xf32>
    %79 = arith.addf %76, %78 : vector<128x128xf32>
    %80 = vector.shape_cast %0 : vector<2x8x8x128xf32> to vector<128x128xf32>
    %81 = arith.addf %79, %80 : vector<128x128xf32>
    %cst_103 = arith.constant 0.000000e+00 : f32
    %82 = vector.broadcast %cst_103 : f32 to vector<128x128xf32>
    %83 = arith.maximumf %81, %82 : vector<128x128xf32>
    %84 = vector.shape_cast %83 : vector<128x128xf32> to vector<2x8x8x128xf32>
    %c0_104 = arith.constant 0 : index
    %c0_105 = arith.constant 0 : index
    %c0_106 = arith.constant 0 : index
    %c0_107 = arith.constant 0 : index
    %85 = vector.load %arg8[%c0_104, %c0_105, %c0_106, %c0_107] : memref<2x8x8x128xf32, #tpu.memory_space<vmem>>, vector<2x8x8x128xf32>
    tpu.vector_store %arg8[%c0_104, %c0_105, %c0_106, %c0_107], %84 {strides = array<i32>} : memref<2x8x8x128xf32, #tpu.memory_space<vmem>>, vector<2x8x8x128xf32>,
    return
  }
  func.func @transform_0(%arg0: i32) -> (i32, i32, i32, i32) {
    %c0_i32 = arith.constant 0 : i32
    %c0_i32_0 = arith.constant 0 : i32
    %c0_i32_1 = arith.constant 0 : i32
    %c0_i32_2 = arith.constant 0 : i32
    return %arg0, %c0_i32, %c0_i32_0, %c0_i32_1 : i32, i32, i32, i32
  }
  func.func @transform_1(%arg0: i32) -> (i32, i32, i32) {
    %c0_i32 = arith.constant 0 : i32
    %c0_i32_0 = arith.constant 0 : i32
    %c0_i32_1 = arith.constant 0 : i32
    %c0_i32_2 = arith.constant 0 : i32
    return %c0_i32, %c0_i32_0, %c0_i32_1 : i32, i32, i32
  }
  func.func @transform_2(%arg0: i32) -> (i32, i32) {
    %c0_i32 = arith.constant 0 : i32
    %c0_i32_0 = arith.constant 0 : i32
    %c0_i32_1 = arith.constant 0 : i32
    return %c0_i32, %c0_i32_0 : i32, i32
  }
  func.func @transform_3(%arg0: i32) -> (i32, i32) {
    %c0_i32 = arith.constant 0 : i32
    %c0_i32_0 = arith.constant 0 : i32
    %c0_i32_1 = arith.constant 0 : i32
    return %c0_i32, %c0_i32_0 : i32, i32
  }
  func.func @transform_4(%arg0: i32) -> (i32, i32, i32) {
    %c0_i32 = arith.constant 0 : i32
    %c0_i32_0 = arith.constant 0 : i32
    %c0_i32_1 = arith.constant 0 : i32
    %c0_i32_2 = arith.constant 0 : i32
    return %c0_i32, %c0_i32_0, %c0_i32_1 : i32, i32, i32
  }
  func.func @transform_5(%arg0: i32) -> (i32, i32) {
    %c0_i32 = arith.constant 0 : i32
    %c0_i32_0 = arith.constant 0 : i32
    %c0_i32_1 = arith.constant 0 : i32
    return %c0_i32, %c0_i32_0 : i32, i32
  }
  func.func @transform_6(%arg0: i32) -> (i32, i32) {
    %c0_i32 = arith.constant 0 : i32
    %c0_i32_0 = arith.constant 0 : i32
    %c0_i32_1 = arith.constant 0 : i32
    return %c0_i32, %c0_i32_0 : i32, i32
  }
  func.func @transform_7(%arg0: i32) -> (i32, i32, i32, i32) {
    %c0_i32 = arith.constant 0 : i32
    %c0_i32_0 = arith.constant 0 : i32
    %c0_i32_1 = arith.constant 0 : i32
    %c0_i32_2 = arith.constant 0 : i32
    return %arg0, %c0_i32, %c0_i32_0, %c0_i32_1 : i32, i32, i32, i32
  }
}

</mosaic_0001>

<llo_original>
// kernel: tpu_custom_call.1
$region0: #{tpu_custom_call.1}
  #allocation0 [shape = 'u32[]', space=smem, size = 0x4, offset = 0x4, fixed_abs, tag = 'smem constant byte address 0x4 - core index']
  #allocation1 [shape = 'u32[72,128]{1,0:T(1,128)}', space=vmem, size = 0x9000, scoped, tag = 'internal scratch']
  #allocation2 [shape = 'f32[2,10,24,128]{3,2,1,0:T(8,128)}', space=vmem, size = 0x3c000, scoped, tag = 'scratch operand']
  #allocation3 [shape = 'f32[2,10,24,128]{3,2,1,0:T(8,128)}', space=vmem, size = 0x3c000, scoped, tag = 'scratch operand']
  %s0 = inlined_call_operand.hbm [shape: f32[4,8,8,128], index: 0, kind: input, shape index: {}]
  %s1 = inlined_call_operand.hbm [shape: f32[3,384,128], index: 1, kind: input, shape index: {}]
  %s2 = inlined_call_operand.vmem [shape: f32[1,128], index: 2, kind: input, shape index: {}]
  %s3 = inlined_call_operand.vmem [shape: f32[1,128], index: 3, kind: input, shape index: {}]
  %s4 = inlined_call_operand.hbm [shape: f32[3,384,128], index: 4, kind: input, shape index: {}]
  %s5 = inlined_call_operand.vmem [shape: f32[1,128], index: 5, kind: input, shape index: {}]
  %s6 = inlined_call_operand.vmem [shape: f32[1,128], index: 6, kind: input, shape index: {}]
  %s7 = inlined_call_operand.hbm [shape: f32[4,8,8,128], index: 7, kind: output, shape index: {}]
  %s8 = sld [smem:[#allocation0]]
  $region73: #{tpu_custom_call.1} parent=0
    _
  %s10 = ssub.s32 1, %s8
  %s11 = scalar_select 0, %s10, %s8
  $region1: #{tpu_custom_call.1} parent=0
    #allocation4 [shape = 'u8[131072]{0}', space=vmem, size = 0x20000, scoped, tag = 'input window, operand 0']
    #allocation5 [shape = 's32[2]{0}', space=sflag, size = 0x8, scoped, tag = 'scoped memory for tpu_custom_call.1']
    #allocation6 [shape = 's32[2]{0}', space=sflag, size = 0x8, scoped, tag = 'scoped memory for tpu_custom_call.1']
    #allocation7 [shape = 'u8[589824]{0}', space=vmem, size = 0x90000, scoped, tag = 'input window, operand 1, single buffered']
    #allocation8 [shape = 's32[1]{0}', space=sflag, size = 0x4, scoped, tag = 'scoped memory for tpu_custom_call.1']
    #allocation9 [shape = 'u8[589824]{0}', space=vmem, size = 0x90000, scoped, tag = 'input window, operand 4, single buffered']
    #allocation10 [shape = 'u8[131072]{0}', space=vmem, size = 0x20000, scoped, tag = 'output window, operand 0']
    %12 = vsyncpa [#allocation5], 0
    %s13 = scalar_lea.sflag [#allocation5], 1
    %14 = vsyncpa %s13, 0
    %15 = vsyncpa [#allocation8], 0
    %16 = vsyncpa [#allocation6], 0
    %s17 = scalar_lea.sflag [#allocation6], 1
    %18 = vsyncpa %s17, 0
    loop: start=0, step=1, limit=4
    $region2: #{tpu_custom_call.1} parent=1 // loop_pre_header
      _
    $region3: #{tpu_custom_call.1} parent=1 // loop_header
      %s20 = sphi 0, %s24
      %p21 = scmp.ge.s32.totalorder %s20, 4
      %s30 = sphi 0, %s32
      %s33 = sphi 0, %s30
      %s34 = sphi 0, %s33
      %s50 = sphi 0, %s34
      %s54 = sphi 0, %s54
      %s56 = sphi 0, %s54
      %s57 = sphi 0, %s56
      %s71 = sphi 0, %s57
      %s75 = sphi 0, %s75
      %s77 = sphi 0, %s75
      %s78 = sphi 0, %s77
      %s92 = sphi 0, %s78
      %s96 = sphi 0, %s96
      %s98 = sphi 0, %s96
      %s99 = sphi 0, %s98
      %s113 = sphi 0, %s99
      %s117 = sphi 0, %s117
      %s119 = sphi 0, %s117
      %s120 = sphi 0, %s119
      %s134 = sphi 0, %s120
      %s138 = sphi 0, %s138
      %s140 = sphi 0, %s138
      %s141 = sphi 0, %s140
      %s155 = sphi 0, %s141
      %s159 = sphi 0, %s159
      %s161 = sphi 0, %s159
      %s162 = sphi 0, %s161
      %s176 = sphi 0, %s162
      %s182 = sphi 0, %s184
      %s185 = sphi 0, %s182
      %s186 = sphi 0, %s185
      %s202 = sphi 0, %s186
    $region4: #{tpu_custom_call.1} parent=1 // loop_header_branch
      %23 = sbr.rel (%p21) target = $region8
    $region5: #{tpu_custom_call.1} parent=1 // loop_body
      %s25 = ssub.s32 %s20, 1
      %s26 = ssub.s32 %s20, 2
      %s27 = sadd.s32 %s20, 1
      %s28 = ssub.s32 %s20, %s27
      %p29 = scmp.eq.s32.totalorder %s28, 0
      %s31 = sadd.s32 %s30, 1
      %s32 = scalar_select %p29, %s30, %s31
      %p35 = pneg %p29
      %p36 = scmp.eq.s32.totalorder %s20, 1
      %p37 = por %p35, %p36
      %p38 = scmp.ne.s32.totalorder %s30, %s33
      %p39 = scmp.eq.s32.totalorder %s20, 0
      %p40 = por %p38, %p39
      %p41 = scmp.ne.s32.totalorder %s30, %s33
      %p42 = scmp.eq.s32.totalorder %s25, 1
      %p43 = por %p41, %p42
      %p44 = scmp.ne.s32.totalorder %s33, %s34
      %p45 = scmp.eq.s32.totalorder %s25, 0
      %p46 = por %p44, %p45
      %p47 = scmp.ne.s32.totalorder %s33, %s34
      %p48 = scmp.eq.s32.totalorder %s26, 1
      %p49 = por %p47, %p48
      %p51 = scmp.ne.s32.totalorder %s34, %s50
      %p52 = scmp.eq.s32.totalorder %s26, 0
      %p53 = por %p51, %p52
      %s55 = sadd.s32 %s54, 1
      %p58 = scmp.eq.s32.totalorder %s20, 1
      %p59 = scmp.ne.s32.totalorder %s54, %s56
      %p60 = scmp.eq.s32.totalorder %s20, 0
      %p61 = por %p59, %p60
      %p62 = scmp.ne.s32.totalorder %s54, %s56
      %p63 = scmp.eq.s32.totalorder %s25, 1
      %p64 = por %p62, %p63
      %p65 = scmp.ne.s32.totalorder %s56, %s57
      %p66 = scmp.eq.s32.totalorder %s25, 0
      %p67 = por %p65, %p66
      %p68 = scmp.ne.s32.totalorder %s56, %s57
      %p69 = scmp.eq.s32.totalorder %s26, 1
      %p70 = por %p68, %p69
      %p72 = scmp.ne.s32.totalorder %s57, %s71
      %p73 = scmp.eq.s32.totalorder %s26, 0
      %p74 = por %p72, %p73
      %s76 = sadd.s32 %s75, 1
      %p79 = scmp.eq.s32.totalorder %s20, 1
      %p80 = scmp.ne.s32.totalorder %s75, %s77
      %p81 = scmp.eq.s32.totalorder %s20, 0
      %p82 = por %p80, %p81
      %p83 = scmp.ne.s32.totalorder %s75, %s77
      %p84 = scmp.eq.s32.totalorder %s25, 1
      %p85 = por %p83, %p84
      %p86 = scmp.ne.s32.totalorder %s77, %s78
      %p87 = scmp.eq.s32.totalorder %s25, 0
      %p88 = por %p86, %p87
      %p89 = scmp.ne.s32.totalorder %s77, %s78
      %p90 = scmp.eq.s32.totalorder %s26, 1
      %p91 = por %p89, %p90
      %p93 = scmp.ne.s32.totalorder %s78, %s92
      %p94 = scmp.eq.s32.totalorder %s26, 0
      %p95 = por %p93, %p94
      %s97 = sadd.s32 %s96, 1
      %p100 = scmp.eq.s32.totalorder %s20, 1
      %p101 = scmp.ne.s32.totalorder %s96, %s98
      %p102 = scmp.eq.s32.totalorder %s20, 0
      %p103 = por %p101, %p102
      %p104 = scmp.ne.s32.totalorder %s96, %s98
      %p105 = scmp.eq.s32.totalorder %s25, 1
      %p106 = por %p104, %p105
      %p107 = scmp.ne.s32.totalorder %s98, %s99
      %p108 = scmp.eq.s32.totalorder %s25, 0
      %p109 = por %p107, %p108
      %p110 = scmp.ne.s32.totalorder %s98, %s99
      %p111 = scmp.eq.s32.totalorder %s26, 1
      %p112 = por %p110, %p111
      %p114 = scmp.ne.s32.totalorder %s99, %s113
      %p115 = scmp.eq.s32.totalorder %s26, 0
      %p116 = por %p114, %p115
      %s118 = sadd.s32 %s117, 1
      %p121 = scmp.eq.s32.totalorder %s20, 1
      %p122 = scmp.ne.s32.totalorder %s117, %s119
      %p123 = scmp.eq.s32.totalorder %s20, 0
      %p124 = por %p122, %p123
      %p125 = scmp.ne.s32.totalorder %s117, %s119
      %p126 = scmp.eq.s32.totalorder %s25, 1
      %p127 = por %p125, %p126
      %p128 = scmp.ne.s32.totalorder %s119, %s120
      %p129 = scmp.eq.s32.totalorder %s25, 0
      %p130 = por %p128, %p129
      %p131 = scmp.ne.s32.totalorder %s119, %s120
      %p132 = scmp.eq.s32.totalorder %s26, 1
      %p133 = por %p131, %p132
      %p135 = scmp.ne.s32.totalorder %s120, %s134
      %p136 = scmp.eq.s32.totalorder %s26, 0
      %p137 = por %p135, %p136
      %s139 = sadd.s32 %s138, 1
      %p142 = scmp.eq.s32.totalorder %s20, 1
      %p143 = scmp.ne.s32.totalorder %s138, %s140
      %p144 = scmp.eq.s32.totalorder %s20, 0
      %p145 = por %p143, %p144
      %p146 = scmp.ne.s32.totalorder %s138, %s140
      %p147 = scmp.eq.s32.totalorder %s25, 1
      %p148 = por %p146, %p147
      %p149 = scmp.ne.s32.totalorder %s140, %s141
      %p150 = scmp.eq.s32.totalorder %s25, 0
      %p151 = por %p149, %p150
      %p152 = scmp.ne.s32.totalorder %s140, %s141
      %p153 = scmp.eq.s32.totalorder %s26, 1
      %p154 = por %p152, %p153
      %p156 = scmp.ne.s32.totalorder %s141, %s155
      %p157 = scmp.eq.s32.totalorder %s26, 0
      %p158 = por %p156, %p157
      %s160 = sadd.s32 %s159, 1
      %p163 = scmp.eq.s32.totalorder %s20, 1
      %p164 = scmp.ne.s32.totalorder %s159, %s161
      %p165 = scmp.eq.s32.totalorder %s20, 0
      %p166 = por %p164, %p165
      %p167 = scmp.ne.s32.totalorder %s159, %s161
      %p168 = scmp.eq.s32.totalorder %s25, 1
      %p169 = por %p167, %p168
      %p170 = scmp.ne.s32.totalorder %s161, %s162
      %p171 = scmp.eq.s32.totalorder %s25, 0
      %p172 = por %p170, %p171
      %p173 = scmp.ne.s32.totalorder %s161, %s162
      %p174 = scmp.eq.s32.totalorder %s26, 1
      %p175 = por %p173, %p174
      %p177 = scmp.ne.s32.totalorder %s162, %s176
      %p178 = scmp.eq.s32.totalorder %s26, 0
      %p179 = por %p177, %p178
      %s180 = ssub.s32 %s20, %s27
      %p181 = scmp.eq.s32.totalorder %s180, 0
      %s183 = sadd.s32 %s182, 1
      %s184 = scalar_select %p181, %s182, %s183
      %p187 = pneg %p181
      %p188 = scmp.eq.s32.totalorder %s20, 1
      %p189 = por %p187, %p188
      %p190 = scmp.ne.s32.totalorder %s182, %s185
      %p191 = scmp.eq.s32.totalorder %s20, 0
      %p192 = por %p190, %p191
      %p193 = scmp.ne.s32.totalorder %s182, %s185
      %p194 = scmp.eq.s32.totalorder %s25, 1
      %p195 = por %p193, %p194
      %p196 = scmp.ne.s32.totalorder %s185, %s186
      %p197 = scmp.eq.s32.totalorder %s25, 0
      %p198 = por %p196, %p197
      %p199 = scmp.ne.s32.totalorder %s185, %s186
      %p200 = scmp.eq.s32.totalorder %s26, 1
      %p201 = por %p199, %p200
      %p203 = scmp.ne.s32.totalorder %s186, %s202
      %p204 = scmp.eq.s32.totalorder %s26, 0
      %p205 = por %p203, %p204
      %p206 = scmp.le.s32.totalorder 1, %s20
      %p207 = scmp.lt.s32.totalorder %s20, 3
      %p208 = pnand %p206, %p207
      %p209 = pneg %p208
      // Predicated region
      $region9: #{tpu_custom_call.1} parent=5 // pred_check
        _
      $region10: #{tpu_custom_call.1} parent=5 // pred_check_branch
        %211 = sbr.rel (%p208) target = $region12
      $region11: #{tpu_custom_call.1} parent=5 // pred_region
        %s212 = ssub.s32 %s20, 1
        // Predicated region
        $region13: #{tpu_custom_call.1} parent=11 // pred_check
          %p213 = pneg %p67
        $region14: #{tpu_custom_call.1} parent=11 // pred_check_branch
          %215 = sbr.rel (%p213) target = $region16
        $region15: #{tpu_custom_call.1} parent=11 // pred_region
          %217 = vsyncadd [#allocation8], 0
          %s218 = sshll.u32 %s1, 4
          %s219 = int_to_ptr.hbm [resolvable:$true] %s218
          %s220 = sshll.u32 [#allocation7], 4
          %s221 = int_to_ptr.vmem [resolvable:$true] %s220
          %226 = dma.hbm_to_vmem [thread:$0]  %s219, 18432, %s221, [#allocation8], 128, 128, 8
        $region16: #{tpu_custom_call.1} parent=11 // pred_fallthru
          _
        // Predicated region
        $region17: #{tpu_custom_call.1} parent=11 // pred_check
          %p227 = pneg %p88
        $region18: #{tpu_custom_call.1} parent=11 // pred_check_branch
          %229 = sbr.rel (%p227) target = $region20
        $region19: #{tpu_custom_call.1} parent=11 // pred_region
          _
        $region20: #{tpu_custom_call.1} parent=11 // pred_fallthru
          _
        // Predicated region
        $region21: #{tpu_custom_call.1} parent=11 // pred_check
          %p230 = pneg %p109
        $region22: #{tpu_custom_call.1} parent=11 // pred_check_branch
          %232 = sbr.rel (%p230) target = $region24
        $region23: #{tpu_custom_call.1} parent=11 // pred_region
          _
        $region24: #{tpu_custom_call.1} parent=11 // pred_fallthru
          _
        // Predicated region
        $region25: #{tpu_custom_call.1} parent=11 // pred_check
          %p233 = pneg %p130
        $region26: #{tpu_custom_call.1} parent=11 // pred_check_branch
          %235 = sbr.rel (%p233) target = $region28
        $region27: #{tpu_custom_call.1} parent=11 // pred_region
          %237 = vsyncadd [#allocation8], 0
          %s238 = sshll.u32 %s4, 4
          %s239 = int_to_ptr.hbm [resolvable:$true] %s238
          %s240 = sshll.u32 [#allocation9], 4
          %s241 = int_to_ptr.vmem [resolvable:$true] %s240
          %246 = dma.hbm_to_vmem [thread:$0]  %s239, 18432, %s241, [#allocation8], 128, 128, 8
        $region28: #{tpu_custom_call.1} parent=11 // pred_fallthru
          _
        // Predicated region
        $region29: #{tpu_custom_call.1} parent=11 // pred_check
          %p247 = pneg %p151
        $region30: #{tpu_custom_call.1} parent=11 // pred_check_branch
          %249 = sbr.rel (%p247) target = $region32
        $region31: #{tpu_custom_call.1} parent=11 // pred_region
          _
        $region32: #{tpu_custom_call.1} parent=11 // pred_fallthru
          _
        // Predicated region
        $region33: #{tpu_custom_call.1} parent=11 // pred_check
          %p250 = pneg %p172
        $region34: #{tpu_custom_call.1} parent=11 // pred_check_branch
          %252 = sbr.rel (%p250) target = $region36
        $region35: #{tpu_custom_call.1} parent=11 // pred_region
          _
        $region36: #{tpu_custom_call.1} parent=11 // pred_fallthru
          _
      $region12: #{tpu_custom_call.1} parent=5 // pred_fallthru
        _
      %p253 = scmp.lt.s32.totalorder %s20, 2
      // Predicated region
      $region37: #{tpu_custom_call.1} parent=5 // pred_check
        %p254 = pneg %p253
      $region38: #{tpu_custom_call.1} parent=5 // pred_check_branch
        %256 = sbr.rel (%p254) target = $region40
      $region39: #{tpu_custom_call.1} parent=5 // pred_region
        // Predicated region
        $region41: #{tpu_custom_call.1} parent=39 // pred_check
          %p257 = pneg %p40
        $region42: #{tpu_custom_call.1} parent=39 // pred_check_branch
          %259 = sbr.rel (%p257) target = $region44
        $region43: #{tpu_custom_call.1} parent=39 // pred_region
          %s260 = sand.u32 %s30, 1
          %s261 = scalar_lea.sflag [#allocation5], %s260
          %s262 = sand.u32 %s30, 1
          %s263 = smul.addr %s262, 128
          %s264 = scalar_lea.vmem [#allocation4], %s263
          %s265 = smul.u32 2, %s20
          %267 = vsyncadd %s261, 0
          %s268 = smul.addr %s265, 8
          %s269 = smul.addr %s268, 8
          %s270 = scalar_lea.hbm %s0, %s269
          %s271 = sshll.u32 %s270, 4
          %s272 = int_to_ptr.hbm [resolvable:$true] %s271
          %s273 = sshll.u32 %s264, 4
          %s274 = int_to_ptr.vmem [resolvable:$true] %s273
          %279 = dma.hbm_to_vmem [thread:$0]  %s272, 2048, %s274, %s261, 128, 128, 8
        $region44: #{tpu_custom_call.1} parent=39 // pred_fallthru
          _
      $region40: #{tpu_custom_call.1} parent=5 // pred_fallthru
        _
      %p280 = scmp.le.s32.totalorder 1, %s20
      %p281 = scmp.lt.s32.totalorder %s20, 3
      %p282 = pnand %p280, %p281
      %p283 = pneg %p282
      // Predicated region
      $region45: #{tpu_custom_call.1} parent=5 // pred_check
        _
      $region46: #{tpu_custom_call.1} parent=5 // pred_check_branch
        %285 = sbr.rel (%p282) target = $region48
      $region47: #{tpu_custom_call.1} parent=5 // pred_region
        %s286 = ssub.s32 %s20, 1
        %s287 = sand.u32 %s33, 1
        %s288 = scalar_lea.sflag [#allocation5], %s287
        %s289 = sand.u32 %s33, 1
        %s290 = smul.addr %s289, 128
        %s291 = scalar_lea.vmem [#allocation4], %s290
        // Predicated region
        $region49: #{tpu_custom_call.1} parent=47 // pred_check
          %p292 = pneg %p46
        $region50: #{tpu_custom_call.1} parent=47 // pred_check_branch
          %294 = sbr.rel (%p292) target = $region52
        $region51: #{tpu_custom_call.1} parent=47 // pred_region
          %296 = dma.done %s288, 2048
        $region52: #{tpu_custom_call.1} parent=47 // pred_fallthru
          _
        // Predicated region
        $region53: #{tpu_custom_call.1} parent=47 // pred_check
          %p297 = pneg %p67
        $region54: #{tpu_custom_call.1} parent=47 // pred_check_branch
          %299 = sbr.rel (%p297) target = $region56
        $region55: #{tpu_custom_call.1} parent=47 // pred_region
          %301 = dma.done [#allocation8], 18432
        $region56: #{tpu_custom_call.1} parent=47 // pred_fallthru
          _
        // Predicated region
        $region57: #{tpu_custom_call.1} parent=47 // pred_check
          %p302 = pneg %p130
        $region58: #{tpu_custom_call.1} parent=47 // pred_check_branch
          %304 = sbr.rel (%p302) target = $region60
        $region59: #{tpu_custom_call.1} parent=47 // pred_region
          %306 = dma.done [#allocation8], 18432
        $region60: #{tpu_custom_call.1} parent=47 // pred_fallthru
          _
        %s307 = sand.u32 %s33, 1
        %s308 = scalar_lea.sflag [#allocation5], %s307
        %s309 = sand.u32 %s33, 1
        %s310 = smul.addr %s309, 128
        %s311 = scalar_lea.vmem [#allocation4], %s310
        %p312 = pneg %p46
        %p313 = pneg %p43
        %p314 = pneg %p67
        %p315 = pneg %p64
        %p316 = pneg %p88
        %p317 = pneg %p85
        %p318 = pneg %p109
        %p319 = pneg %p106
        %p320 = pneg %p130
        %p321 = pneg %p127
        %p322 = pneg %p151
        %p323 = pneg %p148
        %p324 = pneg %p172
        %p325 = pneg %p169
        %p326 = pneg %p198
        %p327 = pneg %p195
        %s328 = sand.u32 %s185, 1
        %s329 = scalar_lea.sflag [#allocation6], %s328
        %s330 = sand.u32 %s185, 1
        %s331 = smul.addr %s330, 128
        %s332 = scalar_lea.vmem [#allocation10], %s331
        %s333 = smul.u32 2, %s25
        %s334 = smul.u32 2, %s25
        %v335 = vld [vmem:[%s291] sm:$0xff]
        %v336 = vld [vmem:[%s291 + $0x8] sm:$0xff]
        %v337 = vld [vmem:[%s291 + $0x10] sm:$0xff]
        %v338 = vld [vmem:[%s291 + $0x18] sm:$0xff]
        %v339 = vld [vmem:[%s291 + $0x20] sm:$0xff]
        %v340 = vld [vmem:[%s291 + $0x28] sm:$0xff]
        %v341 = vld [vmem:[%s291 + $0x30] sm:$0xff]
        %v342 = vld [vmem:[%s291 + $0x38] sm:$0xff]
        %v343 = vld [vmem:[%s291 + $0x40] sm:$0xff]
        %v344 = vld [vmem:[%s291 + $0x48] sm:$0xff]
        %v345 = vld [vmem:[%s291 + $0x50] sm:$0xff]
        %v346 = vld [vmem:[%s291 + $0x58] sm:$0xff]
        %v347 = vld [vmem:[%s291 + $0x60] sm:$0xff]
        %v348 = vld [vmem:[%s291 + $0x68] sm:$0xff]
        %v349 = vld [vmem:[%s291 + $0x70] sm:$0xff]
        %v350 = vld [vmem:[%s291 + $0x78] sm:$0xff]
        %351 = vst [vmem:[#allocation2] sm:$0xff] 0.0
        %352 = vst [vmem:[#allocation2 + $0x18] sm:$0xff] 0.0
        %353 = vst [vmem:[#allocation2 + $0x30] sm:$0xff] 0.0
        %354 = vst [vmem:[#allocation2 + $0x48] sm:$0xff] 0.0
        %355 = vst [vmem:[#allocation2 + $0x60] sm:$0xff] 0.0
        %356 = vst [vmem:[#allocation2 + $0x78] sm:$0xff] 0.0
        %357 = vst [vmem:[#allocation2 + $0x90] sm:$0xff] 0.0
        %358 = vst [vmem:[#allocation2 + $0xa8] sm:$0xff] 0.0
        %359 = vst [vmem:[#allocation2 + $0xc0] sm:$0xff] 0.0
        %360 = vst [vmem:[#allocation2 + $0xd8] sm:$0xff] 0.0
        %361 = vst [vmem:[#allocation2 + $0xf0] sm:$0xff] 0.0
        %362 = vst [vmem:[#allocation2 + $0x108] sm:$0xff] 0.0
        %363 = vst [vmem:[#allocation2 + $0x120] sm:$0xff] 0.0
        %364 = vst [vmem:[#allocation2 + $0x138] sm:$0xff] 0.0
        %365 = vst [vmem:[#allocation2 + $0x150] sm:$0xff] 0.0
        %366 = vst [vmem:[#allocation2 + $0x168] sm:$0xff] 0.0
        %367 = vst [vmem:[#allocation2 + $0x180] sm:$0xff] 0.0
        %368 = vst [vmem:[#allocation2 + $0x198] sm:$0xff] 0.0
        %369 = vst [vmem:[#allocation2 + $0x1b0] sm:$0xff] 0.0
        %370 = vst [vmem:[#allocation2 + $0x1c8] sm:$0xff] 0.0
        %371 = vst [vmem:[#allocation2 + $0x10] sm:$0xff] 0.0
        %372 = vst [vmem:[#allocation2 + $0x28] sm:$0xff] 0.0
        %373 = vst [vmem:[#allocation2 + $0x40] sm:$0xff] 0.0
        %374 = vst [vmem:[#allocation2 + $0x58] sm:$0xff] 0.0
        %375 = vst [vmem:[#allocation2 + $0x70] sm:$0xff] 0.0
        %376 = vst [vmem:[#allocation2 + $0x88] sm:$0xff] 0.0
        %377 = vst [vmem:[#allocation2 + $0xa0] sm:$0xff] 0.0
        %378 = vst [vmem:[#allocation2 + $0xb8] sm:$0xff] 0.0
        %379 = vst [vmem:[#allocation2 + $0xd0] sm:$0xff] 0.0
        %380 = vst [vmem:[#allocation2 + $0xe8] sm:$0xff] 0.0
        %381 = vst [vmem:[#allocation2 + $0x100] sm:$0xff] 0.0
        %382 = vst [vmem:[#allocation2 + $0x118] sm:$0xff] 0.0
        %383 = vst [vmem:[#allocation2 + $0x130] sm:$0xff] 0.0
        %384 = vst [vmem:[#allocation2 + $0x148] sm:$0xff] 0.0
        %385 = vst [vmem:[#allocation2 + $0x160] sm:$0xff] 0.0
        %386 = vst [vmem:[#allocation2 + $0x178] sm:$0xff] 0.0
        %387 = vst [vmem:[#allocation2 + $0x190] sm:$0xff] 0.0
        %388 = vst [vmem:[#allocation2 + $0x1a8] sm:$0xff] 0.0
        %389 = vst [vmem:[#allocation2 + $0x1c0] sm:$0xff] 0.0
        %390 = vst [vmem:[#allocation2 + $0x1d8] sm:$0xff] 0.0
        %391 = vst [vmem:[#allocation2 + $0x8] sm:$0xff] 0.0
        %392 = vst [vmem:[#allocation2 + $0xf8] sm:$0xff] 0.0
        %s393 = scalar_lea.vmem [#allocation2], 216
        %394 = vst [vmem:[%s393 + $0x8] sm:$0xff] 0.0
        %395 = vst [vmem:[%s393 + $0xf8] sm:$0xff] 0.0
        %s396 = scalar_lea.vmem [#allocation2], 24
        %397 = vst [vmem:[%s396 + $0x8] sm:$0xff] %v335
        %398 = vst [vmem:[%s396 + $0x20] sm:$0xff] %v336
        %399 = vst [vmem:[%s396 + $0x38] sm:$0xff] %v337
        %400 = vst [vmem:[%s396 + $0x50] sm:$0xff] %v338
        %401 = vst [vmem:[%s396 + $0x68] sm:$0xff] %v339
        %402 = vst [vmem:[%s396 + $0x80] sm:$0xff] %v340
        %403 = vst [vmem:[%s396 + $0x98] sm:$0xff] %v341
        %404 = vst [vmem:[%s396 + $0xb0] sm:$0xff] %v342
        %405 = vst [vmem:[%s396 + $0xf8] sm:$0xff] %v343
        %406 = vst [vmem:[%s396 + $0x110] sm:$0xff] %v344
        %407 = vst [vmem:[%s396 + $0x128] sm:$0xff] %v345
        %408 = vst [vmem:[%s396 + $0x140] sm:$0xff] %v346
        %409 = vst [vmem:[%s396 + $0x158] sm:$0xff] %v347
        %410 = vst [vmem:[%s396 + $0x170] sm:$0xff] %v348
        %411 = vst [vmem:[%s396 + $0x188] sm:$0xff] %v349
        %412 = vst [vmem:[%s396 + $0x1a0] sm:$0xff] %v350
        %v413 = vld [vmem:[#allocation2 + $0x7] sm:$0xff]
        %v414 = vld [vmem:[#allocation2 + $0x1f] sm:$0xff]
        %v415 = vld [vmem:[#allocation2 + $0x37] sm:$0xff]
        %v416 = vld [vmem:[#allocation2 + $0x4f] sm:$0xff]
        %v417 = vld [vmem:[#allocation2 + $0x67] sm:$0xff]
        %v418 = vld [vmem:[#allocation2 + $0x7f] sm:$0xff]
        %v419 = vld [vmem:[#allocation2 + $0x97] sm:$0xff]
        %v420 = vld [vmem:[#allocation2 + $0xaf] sm:$0xff]
        %v421 = vld [vmem:[#allocation2 + $0xc7] sm:$0xff]
        %v422 = vld [vmem:[#allocation2 + $0xdf] sm:$0xff]
        %v423 = vld [vmem:[#allocation2 + $0xf7] sm:$0xff]
        %v424 = vld [vmem:[#allocation2 + $0x10f] sm:$0xff]
        %v425 = vld [vmem:[#allocation2 + $0x127] sm:$0xff]
        %v426 = vld [vmem:[#allocation2 + $0x13f] sm:$0xff]
        %v427 = vld [vmem:[#allocation2 + $0x157] sm:$0xff]
        %v428 = vld [vmem:[#allocation2 + $0x16f] sm:$0xff]
        %v429 = vld [vmem:[#allocation2 + $0x187] sm:$0xff]
        %v430 = vld [vmem:[#allocation2 + $0x19f] sm:$0xff]
        %v431 = vld [vmem:[#allocation2 + $0x1b7] sm:$0xff]
        %v432 = vld [vmem:[#allocation2 + $0x1cf] sm:$0xff]
        %v433 = vld [vmem:[#allocation2 + $0x8] sm:$0xff]
        %v434 = vld [vmem:[#allocation2 + $0x20] sm:$0xff]
        %v435 = vld [vmem:[#allocation2 + $0x38] sm:$0xff]
        %v436 = vld [vmem:[#allocation2 + $0x50] sm:$0xff]
        %v437 = vld [vmem:[#allocation2 + $0x68] sm:$0xff]
        %v438 = vld [vmem:[#allocation2 + $0x80] sm:$0xff]
        %v439 = vld [vmem:[#allocation2 + $0x98] sm:$0xff]
        %v440 = vld [vmem:[#allocation2 + $0xb0] sm:$0xff]
        %v441 = vld [vmem:[#allocation2 + $0xc8] sm:$0xff]
        %v442 = vld [vmem:[#allocation2 + $0xe0] sm:$0xff]
        %v443 = vld [vmem:[#allocation2 + $0xf8] sm:$0xff]
        %v444 = vld [vmem:[#allocation2 + $0x110] sm:$0xff]
        %v445 = vld [vmem:[#allocation2 + $0x128] sm:$0xff]
        %v446 = vld [vmem:[#allocation2 + $0x140] sm:$0xff]
        %v447 = vld [vmem:[#allocation2 + $0x158] sm:$0xff]
        %v448 = vld [vmem:[#allocation2 + $0x170] sm:$0xff]
        %v449 = vld [vmem:[#allocation2 + $0x188] sm:$0xff]
        %v450 = vld [vmem:[#allocation2 + $0x1a0] sm:$0xff]
        %v451 = vld [vmem:[#allocation2 + $0x1b8] sm:$0xff]
        %v452 = vld [vmem:[#allocation2 + $0x1d0] sm:$0xff]
        %v453 = vld [vmem:[#allocation2 + $0x9] sm:$0xff]
        %v454 = vld [vmem:[#allocation2 + $0x21] sm:$0xff]
        %v455 = vld [vmem:[#allocation2 + $0x39] sm:$0xff]
        %v456 = vld [vmem:[#allocation2 + $0x51] sm:$0xff]
        %v457 = vld [vmem:[#allocation2 + $0x69] sm:$0xff]
        %v458 = vld [vmem:[#allocation2 + $0x81] sm:$0xff]
        %v459 = vld [vmem:[#allocation2 + $0x99] sm:$0xff]
        %v460 = vld [vmem:[#allocation2 + $0xb1] sm:$0xff]
        %v461 = vld [vmem:[#allocation2 + $0xc9] sm:$0xff]
        %v462 = vld [vmem:[#allocation2 + $0xe1] sm:$0xff]
        %v463 = vld [vmem:[#allocation2 + $0xf9] sm:$0xff]
        %v464 = vld [vmem:[#allocation2 + $0x111] sm:$0xff]
        %v465 = vld [vmem:[#allocation2 + $0x129] sm:$0xff]
        %v466 = vld [vmem:[#allocation2 + $0x141] sm:$0xff]
        %v467 = vld [vmem:[#allocation2 + $0x159] sm:$0xff]
        %v468 = vld [vmem:[#allocation2 + $0x171] sm:$0xff]
        %v469 = vld [vmem:[#allocation2 + $0x189] sm:$0xff]
        %v470 = vld [vmem:[#allocation2 + $0x1a1] sm:$0xff]
        %v471 = vld [vmem:[#allocation2 + $0x1b9] sm:$0xff]
        %v472 = vld [vmem:[#allocation2 + $0x1d1] sm:$0xff]
        %v473 = vld [vmem:[#allocation7] sm:$0xff]
        %v474 = vld [vmem:[#allocation7 + $0x8] sm:$0xff]
        %v475 = vld [vmem:[#allocation7 + $0x10] sm:$0xff]
        %v476 = vld [vmem:[#allocation7 + $0x18] sm:$0xff]
        %v477 = vld [vmem:[#allocation7 + $0x20] sm:$0xff]
        %v478 = vld [vmem:[#allocation7 + $0x28] sm:$0xff]
        %v479 = vld [vmem:[#allocation7 + $0x30] sm:$0xff]
        %v480 = vld [vmem:[#allocation7 + $0x38] sm:$0xff]
        %v481 = vld [vmem:[#allocation7 + $0x40] sm:$0xff]
        %v482 = vld [vmem:[#allocation7 + $0x48] sm:$0xff]
        %v483 = vld [vmem:[#allocation7 + $0x50] sm:$0xff]
        %v484 = vld [vmem:[#allocation7 + $0x58] sm:$0xff]
        %v485 = vld [vmem:[#allocation7 + $0x60] sm:$0xff]
        %v486 = vld [vmem:[#allocation7 + $0x68] sm:$0xff]
        %v487 = vld [vmem:[#allocation7 + $0x70] sm:$0xff]
        %v488 = vld [vmem:[#allocation7 + $0x78] sm:$0xff]
        %v489 = vld [vmem:[#allocation7 + $0x80] sm:$0xff]
        %v490 = vld [vmem:[#allocation7 + $0x88] sm:$0xff]
        %v491 = vld [vmem:[#allocation7 + $0x90] sm:$0xff]
        %v492 = vld [vmem:[#allocation7 + $0x98] sm:$0xff]
        %v493 = vld [vmem:[#allocation7 + $0xa0] sm:$0xff]
        %v494 = vld [vmem:[#allocation7 + $0xa8] sm:$0xff]
        %v495 = vld [vmem:[#allocation7 + $0xb0] sm:$0xff]
        %v496 = vld [vmem:[#allocation7 + $0xb8] sm:$0xff]
        %v497 = vld [vmem:[#allocation7 + $0xc0] sm:$0xff]
        %v498 = vld [vmem:[#allocation7 + $0xc8] sm:$0xff]
        %v499 = vld [vmem:[#allocation7 + $0xd0] sm:$0xff]
        %v500 = vld [vmem:[#allocation7 + $0xd8] sm:$0xff]
        %v501 = vld [vmem:[#allocation7 + $0xe0] sm:$0xff]
        %v502 = vld [vmem:[#allocation7 + $0xe8] sm:$0xff]
        %v503 = vld [vmem:[#allocation7 + $0xf0] sm:$0xff]
        %v504 = vld [vmem:[#allocation7 + $0xf8] sm:$0xff]
        %v505 = vld [vmem:[#allocation7 + $0x100] sm:$0xff]
        %v506 = vld [vmem:[#allocation7 + $0x108] sm:$0xff]
        %v507 = vld [vmem:[#allocation7 + $0x110] sm:$0xff]
        %v508 = vld [vmem:[#allocation7 + $0x118] sm:$0xff]
        %v509 = vld [vmem:[#allocation7 + $0x120] sm:$0xff]
        %v510 = vld [vmem:[#allocation7 + $0x128] sm:$0xff]
        %v511 = vld [vmem:[#allocation7 + $0x130] sm:$0xff]
        %v512 = vld [vmem:[#allocation7 + $0x138] sm:$0xff]
        %v513 = vld [vmem:[#allocation7 + $0x140] sm:$0xff]
        %v514 = vld [vmem:[#allocation7 + $0x148] sm:$0xff]
        %v515 = vld [vmem:[#allocation7 + $0x150] sm:$0xff]
        %v516 = vld [vmem:[#allocation7 + $0x158] sm:$0xff]
        %v517 = vld [vmem:[#allocation7 + $0x160] sm:$0xff]
        %v518 = vld [vmem:[#allocation7 + $0x168] sm:$0xff]
        %v519 = vld [vmem:[#allocation7 + $0x170] sm:$0xff]
        %v520 = vld [vmem:[#allocation7 + $0x178] sm:$0xff]
        %s521 = scalar_lea.vmem [#allocation7], 384
        %v522 = vld [vmem:[%s521] sm:$0xff]
        %v523 = vld [vmem:[%s521 + $0x8] sm:$0xff]
        %v524 = vld [vmem:[%s521 + $0x10] sm:$0xff]
        %v525 = vld [vmem:[%s521 + $0x18] sm:$0xff]
        %v526 = vld [vmem:[%s521 + $0x20] sm:$0xff]
        %v527 = vld [vmem:[%s521 + $0x28] sm:$0xff]
        %v528 = vld [vmem:[%s521 + $0x30] sm:$0xff]
        %v529 = vld [vmem:[%s521 + $0x38] sm:$0xff]
        %v530 = vld [vmem:[%s521 + $0x40] sm:$0xff]
        %v531 = vld [vmem:[%s521 + $0x48] sm:$0xff]
        %v532 = vld [vmem:[%s521 + $0x50] sm:$0xff]
        %v533 = vld [vmem:[%s521 + $0x58] sm:$0xff]
        %v534 = vld [vmem:[%s521 + $0x60] sm:$0xff]
        %v535 = vld [vmem:[%s521 + $0x68] sm:$0xff]
        %v536 = vld [vmem:[%s521 + $0x70] sm:$0xff]
        %v537 = vld [vmem:[%s521 + $0x78] sm:$0xff]
        %v538 = vld [vmem:[%s521 + $0x80] sm:$0xff]
        %v539 = vld [vmem:[%s521 + $0x88] sm:$0xff]
        %v540 = vld [vmem:[%s521 + $0x90] sm:$0xff]
        %v541 = vld [vmem:[%s521 + $0x98] sm:$0xff]
        %v542 = vld [vmem:[%s521 + $0xa0] sm:$0xff]
        %v543 = vld [vmem:[%s521 + $0xa8] sm:$0xff]
        %v544 = vld [vmem:[%s521 + $0xb0] sm:$0xff]
        %v545 = vld [vmem:[%s521 + $0xb8] sm:$0xff]
        %v546 = vld [vmem:[%s521 + $0xc0] sm:$0xff]
        %v547 = vld [vmem:[%s521 + $0xc8] sm:$0xff]
        %v548 = vld [vmem:[%s521 + $0xd0] sm:$0xff]
        %v549 = vld [vmem:[%s521 + $0xd8] sm:$0xff]
        %v550 = vld [vmem:[%s521 + $0xe0] sm:$0xff]
        %v551 = vld [vmem:[%s521 + $0xe8] sm:$0xff]
        %v552 = vld [vmem:[%s521 + $0xf0] sm:$0xff]
        %v553 = vld [vmem:[%s521 + $0xf8] sm:$0xff]
        %v554 = vld [vmem:[%s521 + $0x100] sm:$0xff]
        %v555 = vld [vmem:[%s521 + $0x108] sm:$0xff]
        %v556 = vld [vmem:[%s521 + $0x110] sm:$0xff]
        %v557 = vld [vmem:[%s521 + $0x118] sm:$0xff]
        %v558 = vld [vmem:[%s521 + $0x120] sm:$0xff]
        %v559 = vld [vmem:[%s521 + $0x128] sm:$0xff]
        %v560 = vld [vmem:[%s521 + $0x130] sm:$0xff]
        %v561 = vld [vmem:[%s521 + $0x138] sm:$0xff]
        %v562 = vld [vmem:[%s521 + $0x140] sm:$0xff]
        %v563 = vld [vmem:[%s521 + $0x148] sm:$0xff]
        %v564 = vld [vmem:[%s521 + $0x150] sm:$0xff]
        %v565 = vld [vmem:[%s521 + $0x158] sm:$0xff]
        %v566 = vld [vmem:[%s521 + $0x160] sm:$0xff]
        %v567 = vld [vmem:[%s521 + $0x168] sm:$0xff]
        %v568 = vld [vmem:[%s521 + $0x170] sm:$0xff]
        %v569 = vld [vmem:[%s521 + $0x178] sm:$0xff]
        %570 = vmatpush.msra.mxu0 %v537
        %571 = vmatpush.msra.mxu0 %v536
        %572 = vmatpush.msra.mxu0 %v535
        %573 = vmatpush.msra.mxu0 %v534
        %574 = vmatpush.msra.mxu0 %v533
        %575 = vmatpush.msra.mxu0 %v532
        %576 = vmatpush.msra.mxu0 %v531
        %577 = vmatpush.msra.mxu0 %v530
        %578 = vmatpush.msra.mxu0 %v529
        %579 = vmatpush.msra.mxu0 %v528
        %580 = vmatpush.msra.mxu0 %v527
        %581 = vmatpush.msra.mxu0 %v526
        %582 = vmatpush.msra.mxu0 %v525
        %583 = vmatpush.msra.mxu0 %v524
        %584 = vmatpush.msra.mxu0 %v523
        %585 = vmatpush.msra.mxu0 %v522
        %586 = vmatmul.f32.gmra.mxu0 %v414
        %v587 = vpop.f32.mrf.mxu0
        %v588 = vadd.f32 0.0, %v587
        %589 = vmatmul.f32.gmra.mxu0 %v415
        %v590 = vpop.f32.mrf.mxu0
        %v591 = vadd.f32 0.0, %v590
        %592 = vmatmul.f32.gmra.mxu0 %v416
        %v593 = vpop.f32.mrf.mxu0
        %v594 = vadd.f32 0.0, %v593
        %595 = vmatmul.f32.gmra.mxu0 %v417
        %v596 = vpop.f32.mrf.mxu0
        %v597 = vadd.f32 0.0, %v596
        %598 = vmatmul.f32.gmra.mxu0 %v418
        %v599 = vpop.f32.mrf.mxu0
        %v600 = vadd.f32 0.0, %v599
        %601 = vmatmul.f32.gmra.mxu0 %v419
        %v602 = vpop.f32.mrf.mxu0
        %v603 = vadd.f32 0.0, %v602
        %604 = vmatmul.f32.gmra.mxu0 %v420
        %v605 = vpop.f32.mrf.mxu0
        %v606 = vadd.f32 0.0, %v605
        %607 = vmatmul.f32.gmra.mxu0 %v421
        %v608 = vpop.f32.mrf.mxu0
        %v609 = vadd.f32 0.0, %v608
        %610 = vmatmul.f32.gmra.mxu0 %v424
        %v611 = vpop.f32.mrf.mxu0
        %v612 = vadd.f32 0.0, %v611
        %613 = vmatmul.f32.gmra.mxu0 %v425
        %v614 = vpop.f32.mrf.mxu0
        %v615 = vadd.f32 0.0, %v614
        %616 = vmatmul.f32.gmra.mxu0 %v426
        %v617 = vpop.f32.mrf.mxu0
        %v618 = vadd.f32 0.0, %v617
        %619 = vmatmul.f32.gmra.mxu0 %v427
        %v620 = vpop.f32.mrf.mxu0
        %v621 = vadd.f32 0.0, %v620
        %622 = vmatmul.f32.gmra.mxu0 %v428
        %v623 = vpop.f32.mrf.mxu0
        %v624 = vadd.f32 0.0, %v623
        %625 = vmatmul.f32.gmra.mxu0 %v429
        %v626 = vpop.f32.mrf.mxu0
        %v627 = vadd.f32 0.0, %v626
        %628 = vmatmul.f32.gmra.mxu0 %v430
        %v629 = vpop.f32.mrf.mxu0
        %v630 = vadd.f32 0.0, %v629
        %631 = vmatmul.f32.gmra.mxu0 %v431
        %v632 = vpop.f32.mrf.mxu0
        %v633 = vadd.f32 0.0, %v632
        %634 = vdwg.mxu0
        %635 = vmatpush.msra.mxu0 %v553
        %636 = vmatpush.msra.mxu0 %v552
        %637 = vmatpush.msra.mxu0 %v551
        %638 = vmatpush.msra.mxu0 %v550
        %639 = vmatpush.msra.mxu0 %v549
        %640 = vmatpush.msra.mxu0 %v548
        %641 = vmatpush.msra.mxu0 %v547
        %642 = vmatpush.msra.mxu0 %v546
        %643 = vmatpush.msra.mxu0 %v545
        %644 = vmatpush.msra.mxu0 %v544
        %645 = vmatpush.msra.mxu0 %v543
        %646 = vmatpush.msra.mxu0 %v542
        %647 = vmatpush.msra.mxu0 %v541
        %648 = vmatpush.msra.mxu0 %v540
        %649 = vmatpush.msra.mxu0 %v539
        %650 = vmatpush.msra.mxu0 %v538
        %651 = vmatmul.f32.gmra.mxu0 %v434
        %v652 = vpop.f32.mrf.mxu0
        %v653 = vadd.f32 %v588, %v652
        %654 = vmatmul.f32.gmra.mxu0 %v435
        %v655 = vpop.f32.mrf.mxu0
        %v656 = vadd.f32 %v591, %v655
        %657 = vmatmul.f32.gmra.mxu0 %v436
        %v658 = vpop.f32.mrf.mxu0
        %v659 = vadd.f32 %v594, %v658
        %660 = vmatmul.f32.gmra.mxu0 %v437
        %v661 = vpop.f32.mrf.mxu0
        %v662 = vadd.f32 %v597, %v661
        %663 = vmatmul.f32.gmra.mxu0 %v438
        %v664 = vpop.f32.mrf.mxu0
        %v665 = vadd.f32 %v600, %v664
        %666 = vmatmul.f32.gmra.mxu0 %v439
        %v667 = vpop.f32.mrf.mxu0
        %v668 = vadd.f32 %v603, %v667
        %669 = vmatmul.f32.gmra.mxu0 %v440
        %v670 = vpop.f32.mrf.mxu0
        %v671 = vadd.f32 %v606, %v670
        %672 = vmatmul.f32.gmra.mxu0 %v441
        %v673 = vpop.f32.mrf.mxu0
        %v674 = vadd.f32 %v609, %v673
        %675 = vmatmul.f32.gmra.mxu0 %v444
        %v676 = vpop.f32.mrf.mxu0
        %v677 = vadd.f32 %v612, %v676
        %678 = vmatmul.f32.gmra.mxu0 %v445
        %v679 = vpop.f32.mrf.mxu0
        %v680 = vadd.f32 %v615, %v679
        %681 = vmatmul.f32.gmra.mxu0 %v446
        %v682 = vpop.f32.mrf.mxu0
        %v683 = vadd.f32 %v618, %v682
        %684 = vmatmul.f32.gmra.mxu0 %v447
        %v685 = vpop.f32.mrf.mxu0
        %v686 = vadd.f32 %v621, %v685
        %687 = vmatmul.f32.gmra.mxu0 %v448
        %v688 = vpop.f32.mrf.mxu0
        %v689 = vadd.f32 %v624, %v688
        %690 = vmatmul.f32.gmra.mxu0 %v449
        %v691 = vpop.f32.mrf.mxu0
        %v692 = vadd.f32 %v627, %v691
        %693 = vmatmul.f32.gmra.mxu0 %v450
        %v694 = vpop.f32.mrf.mxu0
        %v695 = vadd.f32 %v630, %v694
        %696 = vmatmul.f32.gmra.mxu0 %v451
        %v697 = vpop.f32.mrf.mxu0
        %v698 = vadd.f32 %v633, %v697
        %699 = vdwg.mxu0
        %700 = vmatpush.msra.mxu0 %v569
        %701 = vmatpush.msra.mxu0 %v568
        %702 = vmatpush.msra.mxu0 %v567
        %703 = vmatpush.msra.mxu0 %v566
        %704 = vmatpush.msra.mxu0 %v565
        %705 = vmatpush.msra.mxu0 %v564
        %706 = vmatpush.msra.mxu0 %v563
        %707 = vmatpush.msra.mxu0 %v562
        %708 = vmatpush.msra.mxu0 %v561
        %709 = vmatpush.msra.mxu0 %v560
        %710 = vmatpush.msra.mxu0 %v559
        %711 = vmatpush.msra.mxu0 %v558
        %712 = vmatpush.msra.mxu0 %v557
        %713 = vmatpush.msra.mxu0 %v556
        %714 = vmatpush.msra.mxu0 %v555
        %715 = vmatpush.msra.mxu0 %v554
        %716 = vmatmul.f32.gmra.mxu0 %v454
        %v717 = vpop.f32.mrf.mxu0
        %v718 = vadd.f32 %v653, %v717
        %719 = vmatmul.f32.gmra.mxu0 %v455
        %v720 = vpop.f32.mrf.mxu0
        %v721 = vadd.f32 %v656, %v720
        %722 = vmatmul.f32.gmra.mxu0 %v456
        %v723 = vpop.f32.mrf.mxu0
        %v724 = vadd.f32 %v659, %v723
        %725 = vmatmul.f32.gmra.mxu0 %v457
        %v726 = vpop.f32.mrf.mxu0
        %v727 = vadd.f32 %v662, %v726
        %728 = vmatmul.f32.gmra.mxu0 %v458
        %v729 = vpop.f32.mrf.mxu0
        %v730 = vadd.f32 %v665, %v729
        %731 = vmatmul.f32.gmra.mxu0 %v459
        %v732 = vpop.f32.mrf.mxu0
        %v733 = vadd.f32 %v668, %v732
        %734 = vmatmul.f32.gmra.mxu0 %v460
        %v735 = vpop.f32.mrf.mxu0
        %v736 = vadd.f32 %v671, %v735
        %737 = vmatmul.f32.gmra.mxu0 %v461
        %v738 = vpop.f32.mrf.mxu0
        %v739 = vadd.f32 %v674, %v738
        %740 = vmatmul.f32.gmra.mxu0 %v464
        %v741 = vpop.f32.mrf.mxu0
        %v742 = vadd.f32 %v677, %v741
        %743 = vmatmul.f32.gmra.mxu0 %v465
        %v744 = vpop.f32.mrf.mxu0
        %v745 = vadd.f32 %v680, %v744
        %746 = vmatmul.f32.gmra.mxu0 %v466
        %v747 = vpop.f32.mrf.mxu0
        %v748 = vadd.f32 %v683, %v747
        %749 = vmatmul.f32.gmra.mxu0 %v467
        %v750 = vpop.f32.mrf.mxu0
        %v751 = vadd.f32 %v686, %v750
        %752 = vmatmul.f32.gmra.mxu0 %v468
        %v753 = vpop.f32.mrf.mxu0
        %v754 = vadd.f32 %v689, %v753
        %755 = vmatmul.f32.gmra.mxu0 %v469
        %v756 = vpop.f32.mrf.mxu0
        %v757 = vadd.f32 %v692, %v756
        %758 = vmatmul.f32.gmra.mxu0 %v470
        %v759 = vpop.f32.mrf.mxu0
        %v760 = vadd.f32 %v695, %v759
        %761 = vmatmul.f32.gmra.mxu0 %v471
        %v762 = vpop.f32.mrf.mxu0
        %v763 = vadd.f32 %v698, %v762
        %764 = vdwg.mxu0
        %765 = vmatpush.msra.mxu0 %v488
        %766 = vmatpush.msra.mxu0 %v487
        %767 = vmatpush.msra.mxu0 %v486
        %768 = vmatpush.msra.mxu0 %v485
        %769 = vmatpush.msra.mxu0 %v484
        %770 = vmatpush.msra.mxu0 %v483
        %771 = vmatpush.msra.mxu0 %v482
        %772 = vmatpush.msra.mxu0 %v481
        %773 = vmatpush.msra.mxu0 %v480
        %774 = vmatpush.msra.mxu0 %v479
        %775 = vmatpush.msra.mxu0 %v478
        %776 = vmatpush.msra.mxu0 %v477
        %777 = vmatpush.msra.mxu0 %v476
        %778 = vmatpush.msra.mxu0 %v475
        %779 = vmatpush.msra.mxu0 %v474
        %780 = vmatpush.msra.mxu0 %v473
        %781 = vmatmul.f32.gmra.mxu0 %v413
        %v782 = vpop.f32.mrf.mxu0
        %v783 = vadd.f32 %v718, %v782
        %784 = vmatmul.f32.gmra.mxu0 %v414
        %v785 = vpop.f32.mrf.mxu0
        %v786 = vadd.f32 %v721, %v785
        %787 = vmatmul.f32.gmra.mxu0 %v415
        %v788 = vpop.f32.mrf.mxu0
        %v789 = vadd.f32 %v724, %v788
        %790 = vmatmul.f32.gmra.mxu0 %v416
        %v791 = vpop.f32.mrf.mxu0
        %v792 = vadd.f32 %v727, %v791
        %793 = vmatmul.f32.gmra.mxu0 %v417
        %v794 = vpop.f32.mrf.mxu0
        %v795 = vadd.f32 %v730, %v794
        %796 = vmatmul.f32.gmra.mxu0 %v418
        %v797 = vpop.f32.mrf.mxu0
        %v798 = vadd.f32 %v733, %v797
        %799 = vmatmul.f32.gmra.mxu0 %v419
        %v800 = vpop.f32.mrf.mxu0
        %v801 = vadd.f32 %v736, %v800
        %802 = vmatmul.f32.gmra.mxu0 %v420
        %v803 = vpop.f32.mrf.mxu0
        %v804 = vadd.f32 %v739, %v803
        %805 = vmatmul.f32.gmra.mxu0 %v423
        %v806 = vpop.f32.mrf.mxu0
        %v807 = vadd.f32 %v742, %v806
        %808 = vmatmul.f32.gmra.mxu0 %v424
        %v809 = vpop.f32.mrf.mxu0
        %v810 = vadd.f32 %v745, %v809
        %811 = vmatmul.f32.gmra.mxu0 %v425
        %v812 = vpop.f32.mrf.mxu0
        %v813 = vadd.f32 %v748, %v812
        %814 = vmatmul.f32.gmra.mxu0 %v426
        %v815 = vpop.f32.mrf.mxu0
        %v816 = vadd.f32 %v751, %v815
        %817 = vmatmul.f32.gmra.mxu0 %v427
        %v818 = vpop.f32.mrf.mxu0
        %v819 = vadd.f32 %v754, %v818
        %820 = vmatmul.f32.gmra.mxu0 %v428
        %v821 = vpop.f32.mrf.mxu0
        %v822 = vadd.f32 %v757, %v821
        %823 = vmatmul.f32.gmra.mxu0 %v429
        %v824 = vpop.f32.mrf.mxu0
        %v825 = vadd.f32 %v760, %v824
        %826 = vmatmul.f32.gmra.mxu0 %v430
        %v827 = vpop.f32.mrf.mxu0
        %v828 = vadd.f32 %v763, %v827
        %829 = vdwg.mxu0
        %830 = vmatpush.msra.mxu0 %v504
        %831 = vmatpush.msra.mxu0 %v503
        %832 = vmatpush.msra.mxu0 %v502
        %833 = vmatpush.msra.mxu0 %v501
        %834 = vmatpush.msra.mxu0 %v500
        %835 = vmatpush.msra.mxu0 %v499
        %836 = vmatpush.msra.mxu0 %v498
        %837 = vmatpush.msra.mxu0 %v497
        %838 = vmatpush.msra.mxu0 %v496
        %839 = vmatpush.msra.mxu0 %v495
        %840 = vmatpush.msra.mxu0 %v494
        %841 = vmatpush.msra.mxu0 %v493
        %842 = vmatpush.msra.mxu0 %v492
        %843 = vmatpush.msra.mxu0 %v491
        %844 = vmatpush.msra.mxu0 %v490
        %845 = vmatpush.msra.mxu0 %v489
        %846 = vmatmul.f32.gmra.mxu0 %v433
        %v847 = vpop.f32.mrf.mxu0
        %v848 = vadd.f32 %v783, %v847
        %849 = vmatmul.f32.gmra.mxu0 %v434
        %v850 = vpop.f32.mrf.mxu0
        %v851 = vadd.f32 %v786, %v850
        %852 = vmatmul.f32.gmra.mxu0 %v435
        %v853 = vpop.f32.mrf.mxu0
        %v854 = vadd.f32 %v789, %v853
        %855 = vmatmul.f32.gmra.mxu0 %v436
        %v856 = vpop.f32.mrf.mxu0
        %v857 = vadd.f32 %v792, %v856
        %858 = vmatmul.f32.gmra.mxu0 %v437
        %v859 = vpop.f32.mrf.mxu0
        %v860 = vadd.f32 %v795, %v859
        %861 = vmatmul.f32.gmra.mxu0 %v438
        %v862 = vpop.f32.mrf.mxu0
        %v863 = vadd.f32 %v798, %v862
        %864 = vmatmul.f32.gmra.mxu0 %v439
        %v865 = vpop.f32.mrf.mxu0
        %v866 = vadd.f32 %v801, %v865
        %867 = vmatmul.f32.gmra.mxu0 %v440
        %v868 = vpop.f32.mrf.mxu0
        %v869 = vadd.f32 %v804, %v868
        %870 = vmatmul.f32.gmra.mxu0 %v443
        %v871 = vpop.f32.mrf.mxu0
        %v872 = vadd.f32 %v807, %v871
        %873 = vmatmul.f32.gmra.mxu0 %v444
        %v874 = vpop.f32.mrf.mxu0
        %v875 = vadd.f32 %v810, %v874
        %876 = vmatmul.f32.gmra.mxu0 %v445
        %v877 = vpop.f32.mrf.mxu0
        %v878 = vadd.f32 %v813, %v877
        %879 = vmatmul.f32.gmra.mxu0 %v446
        %v880 = vpop.f32.mrf.mxu0
        %v881 = vadd.f32 %v816, %v880
        %882 = vmatmul.f32.gmra.mxu0 %v447
        %v883 = vpop.f32.mrf.mxu0
        %v884 = vadd.f32 %v819, %v883
        %885 = vmatmul.f32.gmra.mxu0 %v448
        %v886 = vpop.f32.mrf.mxu0
        %v887 = vadd.f32 %v822, %v886
        %888 = vmatmul.f32.gmra.mxu0 %v449
        %v889 = vpop.f32.mrf.mxu0
        %v890 = vadd.f32 %v825, %v889
        %891 = vmatmul.f32.gmra.mxu0 %v450
        %v892 = vpop.f32.mrf.mxu0
        %v893 = vadd.f32 %v828, %v892
        %894 = vdwg.mxu0
        %895 = vmatpush.msra.mxu0 %v520
        %896 = vmatpush.msra.mxu0 %v519
        %897 = vmatpush.msra.mxu0 %v518
        %898 = vmatpush.msra.mxu0 %v517
        %899 = vmatpush.msra.mxu0 %v516
        %900 = vmatpush.msra.mxu0 %v515
        %901 = vmatpush.msra.mxu0 %v514
        %902 = vmatpush.msra.mxu0 %v513
        %903 = vmatpush.msra.mxu0 %v512
        %904 = vmatpush.msra.mxu0 %v511
        %905 = vmatpush.msra.mxu0 %v510
        %906 = vmatpush.msra.mxu0 %v509
        %907 = vmatpush.msra.mxu0 %v508
        %908 = vmatpush.msra.mxu0 %v507
        %909 = vmatpush.msra.mxu0 %v506
        %910 = vmatpush.msra.mxu0 %v505
        %911 = vmatmul.f32.gmra.mxu0 %v453
        %v912 = vpop.f32.mrf.mxu0
        %v913 = vadd.f32 %v848, %v912
        %914 = vmatmul.f32.gmra.mxu0 %v454
        %v915 = vpop.f32.mrf.mxu0
        %v916 = vadd.f32 %v851, %v915
        %917 = vmatmul.f32.gmra.mxu0 %v455
        %v918 = vpop.f32.mrf.mxu0
        %v919 = vadd.f32 %v854, %v918
        %920 = vmatmul.f32.gmra.mxu0 %v456
        %v921 = vpop.f32.mrf.mxu0
        %v922 = vadd.f32 %v857, %v921
        %923 = vmatmul.f32.gmra.mxu0 %v457
        %v924 = vpop.f32.mrf.mxu0
        %v925 = vadd.f32 %v860, %v924
        %926 = vmatmul.f32.gmra.mxu0 %v458
        %v927 = vpop.f32.mrf.mxu0
        %v928 = vadd.f32 %v863, %v927
        %929 = vmatmul.f32.gmra.mxu0 %v459
        %v930 = vpop.f32.mrf.mxu0
        %v931 = vadd.f32 %v866, %v930
        %932 = vmatmul.f32.gmra.mxu0 %v460
        %v933 = vpop.f32.mrf.mxu0
        %v934 = vadd.f32 %v869, %v933
        %935 = vmatmul.f32.gmra.mxu0 %v463
        %v936 = vpop.f32.mrf.mxu0
        %v937 = vadd.f32 %v872, %v936
        %938 = vmatmul.f32.gmra.mxu0 %v464
        %v939 = vpop.f32.mrf.mxu0
        %v940 = vadd.f32 %v875, %v939
        %941 = vmatmul.f32.gmra.mxu0 %v465
        %v942 = vpop.f32.mrf.mxu0
        %v943 = vadd.f32 %v878, %v942
        %944 = vmatmul.f32.gmra.mxu0 %v466
        %v945 = vpop.f32.mrf.mxu0
        %v946 = vadd.f32 %v881, %v945
        %947 = vmatmul.f32.gmra.mxu0 %v467
        %v948 = vpop.f32.mrf.mxu0
        %v949 = vadd.f32 %v884, %v948
        %950 = vmatmul.f32.gmra.mxu0 %v468
        %v951 = vpop.f32.mrf.mxu0
        %v952 = vadd.f32 %v887, %v951
        %953 = vmatmul.f32.gmra.mxu0 %v469
        %v954 = vpop.f32.mrf.mxu0
        %v955 = vadd.f32 %v890, %v954
        %956 = vmatmul.f32.gmra.mxu0 %v470
        %v957 = vpop.f32.mrf.mxu0
        %v958 = vadd.f32 %v893, %v957
        %959 = vdwg.mxu0
        %s960 = scalar_lea.vmem [#allocation7], 768
        %v961 = vld [vmem:[%s960] sm:$0xff]
        %v962 = vld [vmem:[%s960 + $0x8] sm:$0xff]
        %v963 = vld [vmem:[%s960 + $0x10] sm:$0xff]
        %v964 = vld [vmem:[%s960 + $0x18] sm:$0xff]
        %v965 = vld [vmem:[%s960 + $0x20] sm:$0xff]
        %v966 = vld [vmem:[%s960 + $0x28] sm:$0xff]
        %v967 = vld [vmem:[%s960 + $0x30] sm:$0xff]
        %v968 = vld [vmem:[%s960 + $0x38] sm:$0xff]
        %v969 = vld [vmem:[%s960 + $0x40] sm:$0xff]
        %v970 = vld [vmem:[%s960 + $0x48] sm:$0xff]
        %v971 = vld [vmem:[%s960 + $0x50] sm:$0xff]
        %v972 = vld [vmem:[%s960 + $0x58] sm:$0xff]
        %v973 = vld [vmem:[%s960 + $0x60] sm:$0xff]
        %v974 = vld [vmem:[%s960 + $0x68] sm:$0xff]
        %v975 = vld [vmem:[%s960 + $0x70] sm:$0xff]
        %v976 = vld [vmem:[%s960 + $0x78] sm:$0xff]
        %v977 = vld [vmem:[%s960 + $0x80] sm:$0xff]
        %v978 = vld [vmem:[%s960 + $0x88] sm:$0xff]
        %v979 = vld [vmem:[%s960 + $0x90] sm:$0xff]
        %v980 = vld [vmem:[%s960 + $0x98] sm:$0xff]
        %v981 = vld [vmem:[%s960 + $0xa0] sm:$0xff]
        %v982 = vld [vmem:[%s960 + $0xa8] sm:$0xff]
        %v983 = vld [vmem:[%s960 + $0xb0] sm:$0xff]
        %v984 = vld [vmem:[%s960 + $0xb8] sm:$0xff]
        %v985 = vld [vmem:[%s960 + $0xc0] sm:$0xff]
        %v986 = vld [vmem:[%s960 + $0xc8] sm:$0xff]
        %v987 = vld [vmem:[%s960 + $0xd0] sm:$0xff]
        %v988 = vld [vmem:[%s960 + $0xd8] sm:$0xff]
        %v989 = vld [vmem:[%s960 + $0xe0] sm:$0xff]
        %v990 = vld [vmem:[%s960 + $0xe8] sm:$0xff]
        %v991 = vld [vmem:[%s960 + $0xf0] sm:$0xff]
        %v992 = vld [vmem:[%s960 + $0xf8] sm:$0xff]
        %v993 = vld [vmem:[%s960 + $0x100] sm:$0xff]
        %v994 = vld [vmem:[%s960 + $0x108] sm:$0xff]
        %v995 = vld [vmem:[%s960 + $0x110] sm:$0xff]
        %v996 = vld [vmem:[%s960 + $0x118] sm:$0xff]
        %v997 = vld [vmem:[%s960 + $0x120] sm:$0xff]
        %v998 = vld [vmem:[%s960 + $0x128] sm:$0xff]
        %v999 = vld [vmem:[%s960 + $0x130] sm:$0xff]
        %v1000 = vld [vmem:[%s960 + $0x138] sm:$0xff]
        %v1001 = vld [vmem:[%s960 + $0x140] sm:$0xff]
        %v1002 = vld [vmem:[%s960 + $0x148] sm:$0xff]
        %v1003 = vld [vmem:[%s960 + $0x150] sm:$0xff]
        %v1004 = vld [vmem:[%s960 + $0x158] sm:$0xff]
        %v1005 = vld [vmem:[%s960 + $0x160] sm:$0xff]
        %v1006 = vld [vmem:[%s960 + $0x168] sm:$0xff]
        %v1007 = vld [vmem:[%s960 + $0x170] sm:$0xff]
        %v1008 = vld [vmem:[%s960 + $0x178] sm:$0xff]
        %1009 = vmatpush.msra.mxu0 %v976
        %1010 = vmatpush.msra.mxu0 %v975
        %1011 = vmatpush.msra.mxu0 %v974
        %1012 = vmatpush.msra.mxu0 %v973
        %1013 = vmatpush.msra.mxu0 %v972
        %1014 = vmatpush.msra.mxu0 %v971
        %1015 = vmatpush.msra.mxu0 %v970
        %1016 = vmatpush.msra.mxu0 %v969
        %1017 = vmatpush.msra.mxu0 %v968
        %1018 = vmatpush.msra.mxu0 %v967
        %1019 = vmatpush.msra.mxu0 %v966
        %1020 = vmatpush.msra.mxu0 %v965
        %1021 = vmatpush.msra.mxu0 %v964
        %1022 = vmatpush.msra.mxu0 %v963
        %1023 = vmatpush.msra.mxu0 %v962
        %1024 = vmatpush.msra.mxu0 %v961
        %1025 = vmatmul.f32.gmra.mxu0 %v415
        %v1026 = vpop.f32.mrf.mxu0
        %v1027 = vadd.f32 0.0, %v1026
        %1028 = vmatmul.f32.gmra.mxu0 %v416
        %v1029 = vpop.f32.mrf.mxu0
        %v1030 = vadd.f32 0.0, %v1029
        %1031 = vmatmul.f32.gmra.mxu0 %v417
        %v1032 = vpop.f32.mrf.mxu0
        %v1033 = vadd.f32 0.0, %v1032
        %1034 = vmatmul.f32.gmra.mxu0 %v418
        %v1035 = vpop.f32.mrf.mxu0
        %v1036 = vadd.f32 0.0, %v1035
        %1037 = vmatmul.f32.gmra.mxu0 %v419
        %v1038 = vpop.f32.mrf.mxu0
        %v1039 = vadd.f32 0.0, %v1038
        %1040 = vmatmul.f32.gmra.mxu0 %v420
        %v1041 = vpop.f32.mrf.mxu0
        %v1042 = vadd.f32 0.0, %v1041
        %1043 = vmatmul.f32.gmra.mxu0 %v421
        %v1044 = vpop.f32.mrf.mxu0
        %v1045 = vadd.f32 0.0, %v1044
        %1046 = vmatmul.f32.gmra.mxu0 %v422
        %v1047 = vpop.f32.mrf.mxu0
        %v1048 = vadd.f32 0.0, %v1047
        %1049 = vmatmul.f32.gmra.mxu0 %v425
        %v1050 = vpop.f32.mrf.mxu0
        %v1051 = vadd.f32 0.0, %v1050
        %1052 = vmatmul.f32.gmra.mxu0 %v426
        %v1053 = vpop.f32.mrf.mxu0
        %v1054 = vadd.f32 0.0, %v1053
        %1055 = vmatmul.f32.gmra.mxu0 %v427
        %v1056 = vpop.f32.mrf.mxu0
        %v1057 = vadd.f32 0.0, %v1056
        %1058 = vmatmul.f32.gmra.mxu0 %v428
        %v1059 = vpop.f32.mrf.mxu0
        %v1060 = vadd.f32 0.0, %v1059
        %1061 = vmatmul.f32.gmra.mxu0 %v429
        %v1062 = vpop.f32.mrf.mxu0
        %v1063 = vadd.f32 0.0, %v1062
        %1064 = vmatmul.f32.gmra.mxu0 %v430
        %v1065 = vpop.f32.mrf.mxu0
        %v1066 = vadd.f32 0.0, %v1065
        %1067 = vmatmul.f32.gmra.mxu0 %v431
        %v1068 = vpop.f32.mrf.mxu0
        %v1069 = vadd.f32 0.0, %v1068
        %1070 = vmatmul.f32.gmra.mxu0 %v432
        %v1071 = vpop.f32.mrf.mxu0
        %v1072 = vadd.f32 0.0, %v1071
        %1073 = vdwg.mxu0
        %1074 = vmatpush.msra.mxu0 %v992
        %1075 = vmatpush.msra.mxu0 %v991
        %1076 = vmatpush.msra.mxu0 %v990
        %1077 = vmatpush.msra.mxu0 %v989
        %1078 = vmatpush.msra.mxu0 %v988
        %1079 = vmatpush.msra.mxu0 %v987
        %1080 = vmatpush.msra.mxu0 %v986
        %1081 = vmatpush.msra.mxu0 %v985
        %1082 = vmatpush.msra.mxu0 %v984
        %1083 = vmatpush.msra.mxu0 %v983
        %1084 = vmatpush.msra.mxu0 %v982
        %1085 = vmatpush.msra.mxu0 %v981
        %1086 = vmatpush.msra.mxu0 %v980
        %1087 = vmatpush.msra.mxu0 %v979
        %1088 = vmatpush.msra.mxu0 %v978
        %1089 = vmatpush.msra.mxu0 %v977
        %1090 = vmatmul.f32.gmra.mxu0 %v435
        %v1091 = vpop.f32.mrf.mxu0
        %v1092 = vadd.f32 %v1027, %v1091
        %1093 = vmatmul.f32.gmra.mxu0 %v436
        %v1094 = vpop.f32.mrf.mxu0
        %v1095 = vadd.f32 %v1030, %v1094
        %1096 = vmatmul.f32.gmra.mxu0 %v437
        %v1097 = vpop.f32.mrf.mxu0
        %v1098 = vadd.f32 %v1033, %v1097
        %1099 = vmatmul.f32.gmra.mxu0 %v438
        %v1100 = vpop.f32.mrf.mxu0
        %v1101 = vadd.f32 %v1036, %v1100
        %1102 = vmatmul.f32.gmra.mxu0 %v439
        %v1103 = vpop.f32.mrf.mxu0
        %v1104 = vadd.f32 %v1039, %v1103
        %1105 = vmatmul.f32.gmra.mxu0 %v440
        %v1106 = vpop.f32.mrf.mxu0
        %v1107 = vadd.f32 %v1042, %v1106
        %1108 = vmatmul.f32.gmra.mxu0 %v441
        %v1109 = vpop.f32.mrf.mxu0
        %v1110 = vadd.f32 %v1045, %v1109
        %1111 = vmatmul.f32.gmra.mxu0 %v442
        %v1112 = vpop.f32.mrf.mxu0
        %v1113 = vadd.f32 %v1048, %v1112
        %1114 = vmatmul.f32.gmra.mxu0 %v445
        %v1115 = vpop.f32.mrf.mxu0
        %v1116 = vadd.f32 %v1051, %v1115
        %1117 = vmatmul.f32.gmra.mxu0 %v446
        %v1118 = vpop.f32.mrf.mxu0
        %v1119 = vadd.f32 %v1054, %v1118
        %1120 = vmatmul.f32.gmra.mxu0 %v447
        %v1121 = vpop.f32.mrf.mxu0
        %v1122 = vadd.f32 %v1057, %v1121
        %1123 = vmatmul.f32.gmra.mxu0 %v448
        %v1124 = vpop.f32.mrf.mxu0
        %v1125 = vadd.f32 %v1060, %v1124
        %1126 = vmatmul.f32.gmra.mxu0 %v449
        %v1127 = vpop.f32.mrf.mxu0
        %v1128 = vadd.f32 %v1063, %v1127
        %1129 = vmatmul.f32.gmra.mxu0 %v450
        %v1130 = vpop.f32.mrf.mxu0
        %v1131 = vadd.f32 %v1066, %v1130
        %1132 = vmatmul.f32.gmra.mxu0 %v451
        %v1133 = vpop.f32.mrf.mxu0
        %v1134 = vadd.f32 %v1069, %v1133
        %1135 = vmatmul.f32.gmra.mxu0 %v452
        %v1136 = vpop.f32.mrf.mxu0
        %v1137 = vadd.f32 %v1072, %v1136
        %1138 = vdwg.mxu0
        %1139 = vmatpush.msra.mxu0 %v1008
        %1140 = vmatpush.msra.mxu0 %v1007
        %1141 = vmatpush.msra.mxu0 %v1006
        %1142 = vmatpush.msra.mxu0 %v1005
        %1143 = vmatpush.msra.mxu0 %v1004
        %1144 = vmatpush.msra.mxu0 %v1003
        %1145 = vmatpush.msra.mxu0 %v1002
        %1146 = vmatpush.msra.mxu0 %v1001
        %1147 = vmatpush.msra.mxu0 %v1000
        %1148 = vmatpush.msra.mxu0 %v999
        %1149 = vmatpush.msra.mxu0 %v998
        %1150 = vmatpush.msra.mxu0 %v997
        %1151 = vmatpush.msra.mxu0 %v996
        %1152 = vmatpush.msra.mxu0 %v995
        %1153 = vmatpush.msra.mxu0 %v994
        %1154 = vmatpush.msra.mxu0 %v993
        %1155 = vmatmul.f32.gmra.mxu0 %v455
        %v1156 = vpop.f32.mrf.mxu0
        %v1157 = vadd.f32 %v1092, %v1156
        %1158 = vmatmul.f32.gmra.mxu0 %v456
        %v1159 = vpop.f32.mrf.mxu0
        %v1160 = vadd.f32 %v1095, %v1159
        %1161 = vmatmul.f32.gmra.mxu0 %v457
        %v1162 = vpop.f32.mrf.mxu0
        %v1163 = vadd.f32 %v1098, %v1162
        %1164 = vmatmul.f32.gmra.mxu0 %v458
        %v1165 = vpop.f32.mrf.mxu0
        %v1166 = vadd.f32 %v1101, %v1165
        %1167 = vmatmul.f32.gmra.mxu0 %v459
        %v1168 = vpop.f32.mrf.mxu0
        %v1169 = vadd.f32 %v1104, %v1168
        %1170 = vmatmul.f32.gmra.mxu0 %v460
        %v1171 = vpop.f32.mrf.mxu0
        %v1172 = vadd.f32 %v1107, %v1171
        %1173 = vmatmul.f32.gmra.mxu0 %v461
        %v1174 = vpop.f32.mrf.mxu0
        %v1175 = vadd.f32 %v1110, %v1174
        %1176 = vmatmul.f32.gmra.mxu0 %v462
        %v1177 = vpop.f32.mrf.mxu0
        %v1178 = vadd.f32 %v1113, %v1177
        %1179 = vmatmul.f32.gmra.mxu0 %v465
        %v1180 = vpop.f32.mrf.mxu0
        %v1181 = vadd.f32 %v1116, %v1180
        %1182 = vmatmul.f32.gmra.mxu0 %v466
        %v1183 = vpop.f32.mrf.mxu0
        %v1184 = vadd.f32 %v1119, %v1183
        %1185 = vmatmul.f32.gmra.mxu0 %v467
        %v1186 = vpop.f32.mrf.mxu0
        %v1187 = vadd.f32 %v1122, %v1186
        %1188 = vmatmul.f32.gmra.mxu0 %v468
        %v1189 = vpop.f32.mrf.mxu0
        %v1190 = vadd.f32 %v1125, %v1189
        %1191 = vmatmul.f32.gmra.mxu0 %v469
        %v1192 = vpop.f32.mrf.mxu0
        %v1193 = vadd.f32 %v1128, %v1192
        %1194 = vmatmul.f32.gmra.mxu0 %v470
        %v1195 = vpop.f32.mrf.mxu0
        %v1196 = vadd.f32 %v1131, %v1195
        %1197 = vmatmul.f32.gmra.mxu0 %v471
        %v1198 = vpop.f32.mrf.mxu0
        %v1199 = vadd.f32 %v1134, %v1198
        %1200 = vmatmul.f32.gmra.mxu0 %v472
        %v1201 = vpop.f32.mrf.mxu0
        %v1202 = vadd.f32 %v1137, %v1201
        %1203 = vdwg.mxu0
        %v1204 = vadd.f32 %v913, %v1157
        %v1205 = vadd.f32 %v916, %v1160
        %v1206 = vadd.f32 %v919, %v1163
        %v1207 = vadd.f32 %v922, %v1166
        %v1208 = vadd.f32 %v925, %v1169
        %v1209 = vadd.f32 %v928, %v1172
        %v1210 = vadd.f32 %v931, %v1175
        %v1211 = vadd.f32 %v934, %v1178
        %v1212 = vadd.f32 %v937, %v1181
        %v1213 = vadd.f32 %v940, %v1184
        %v1214 = vadd.f32 %v943, %v1187
        %v1215 = vadd.f32 %v946, %v1190
        %v1216 = vadd.f32 %v949, %v1193
        %v1217 = vadd.f32 %v952, %v1196
        %v1218 = vadd.f32 %v955, %v1199
        %v1219 = vadd.f32 %v958, %v1202
        %v1220 = vld [vmem:[%s2] sm:$0x1]
        %v1222 = vperm.slane %v1220, 0
        %v1224 = vmul.f32 %v1204, %v1222
        %v1225 = vmul.f32 %v1205, %v1222
        %v1226 = vmul.f32 %v1206, %v1222
        %v1227 = vmul.f32 %v1207, %v1222
        %v1228 = vmul.f32 %v1208, %v1222
        %v1229 = vmul.f32 %v1209, %v1222
        %v1230 = vmul.f32 %v1210, %v1222
        %v1231 = vmul.f32 %v1211, %v1222
        %v1232 = vmul.f32 %v1212, %v1222
        %v1233 = vmul.f32 %v1213, %v1222
        %v1234 = vmul.f32 %v1214, %v1222
        %v1235 = vmul.f32 %v1215, %v1222
        %v1236 = vmul.f32 %v1216, %v1222
        %v1237 = vmul.f32 %v1217, %v1222
        %v1238 = vmul.f32 %v1218, %v1222
        %v1239 = vmul.f32 %v1219, %v1222
        %v1240 = vld [vmem:[%s3] sm:$0x1]
        %v1242 = vperm.slane %v1240, 0
        %v1244 = vadd.f32 %v1224, %v1242
        %v1245 = vadd.f32 %v1225, %v1242
        %v1246 = vadd.f32 %v1226, %v1242
        %v1247 = vadd.f32 %v1227, %v1242
        %v1248 = vadd.f32 %v1228, %v1242
        %v1249 = vadd.f32 %v1229, %v1242
        %v1250 = vadd.f32 %v1230, %v1242
        %v1251 = vadd.f32 %v1231, %v1242
        %v1252 = vadd.f32 %v1232, %v1242
        %v1253 = vadd.f32 %v1233, %v1242
        %v1254 = vadd.f32 %v1234, %v1242
        %v1255 = vadd.f32 %v1235, %v1242
        %v1256 = vadd.f32 %v1236, %v1242
        %v1257 = vadd.f32 %v1237, %v1242
        %v1258 = vadd.f32 %v1238, %v1242
        %v1259 = vadd.f32 %v1239, %v1242
        %v1260 = vmax.f32 %v1244, 0.0
        %v1261 = vmax.f32 %v1245, 0.0
        %v1262 = vmax.f32 %v1246, 0.0
        %v1263 = vmax.f32 %v1247, 0.0
        %v1264 = vmax.f32 %v1248, 0.0
        %v1265 = vmax.f32 %v1249, 0.0
        %v1266 = vmax.f32 %v1250, 0.0
        %v1267 = vmax.f32 %v1251, 0.0
        %v1268 = vmax.f32 %v1252, 0.0
        %v1269 = vmax.f32 %v1253, 0.0
        %v1270 = vmax.f32 %v1254, 0.0
        %v1271 = vmax.f32 %v1255, 0.0
        %v1272 = vmax.f32 %v1256, 0.0
        %v1273 = vmax.f32 %v1257, 0.0
        %v1274 = vmax.f32 %v1258, 0.0
        %v1275 = vmax.f32 %v1259, 0.0
        %1276 = vst [vmem:[#allocation3] sm:$0xff] 0.0
        %1277 = vst [vmem:[#allocation3 + $0x18] sm:$0xff] 0.0
        %1278 = vst [vmem:[#allocation3 + $0x30] sm:$0xff] 0.0
        %1279 = vst [vmem:[#allocation3 + $0x48] sm:$0xff] 0.0
        %1280 = vst [vmem:[#allocation3 + $0x60] sm:$0xff] 0.0
        %1281 = vst [vmem:[#allocation3 + $0x78] sm:$0xff] 0.0
        %1282 = vst [vmem:[#allocation3 + $0x90] sm:$0xff] 0.0
        %1283 = vst [vmem:[#allocation3 + $0xa8] sm:$0xff] 0.0
        %1284 = vst [vmem:[#allocation3 + $0xc0] sm:$0xff] 0.0
        %1285 = vst [vmem:[#allocation3 + $0xd8] sm:$0xff] 0.0
        %1286 = vst [vmem:[#allocation3 + $0xf0] sm:$0xff] 0.0
        %1287 = vst [vmem:[#allocation3 + $0x108] sm:$0xff] 0.0
        %1288 = vst [vmem:[#allocation3 + $0x120] sm:$0xff] 0.0
        %1289 = vst [vmem:[#allocation3 + $0x138] sm:$0xff] 0.0
        %1290 = vst [vmem:[#allocation3 + $0x150] sm:$0xff] 0.0
        %1291 = vst [vmem:[#allocation3 + $0x168] sm:$0xff] 0.0
        %1292 = vst [vmem:[#allocation3 + $0x180] sm:$0xff] 0.0
        %1293 = vst [vmem:[#allocation3 + $0x198] sm:$0xff] 0.0
        %1294 = vst [vmem:[#allocation3 + $0x1b0] sm:$0xff] 0.0
        %1295 = vst [vmem:[#allocation3 + $0x1c8] sm:$0xff] 0.0
        %1296 = vst [vmem:[#allocation3 + $0x10] sm:$0xff] 0.0
        %1297 = vst [vmem:[#allocation3 + $0x28] sm:$0xff] 0.0
        %1298 = vst [vmem:[#allocation3 + $0x40] sm:$0xff] 0.0
        %1299 = vst [vmem:[#allocation3 + $0x58] sm:$0xff] 0.0
        %1300 = vst [vmem:[#allocation3 + $0x70] sm:$0xff] 0.0
        %1301 = vst [vmem:[#allocation3 + $0x88] sm:$0xff] 0.0
        %1302 = vst [vmem:[#allocation3 + $0xa0] sm:$0xff] 0.0
        %1303 = vst [vmem:[#allocation3 + $0xb8] sm:$0xff] 0.0
        %1304 = vst [vmem:[#allocation3 + $0xd0] sm:$0xff] 0.0
        %1305 = vst [vmem:[#allocation3 + $0xe8] sm:$0xff] 0.0
        %1306 = vst [vmem:[#allocation3 + $0x100] sm:$0xff] 0.0
        %1307 = vst [vmem:[#allocation3 + $0x118] sm:$0xff] 0.0
        %1308 = vst [vmem:[#allocation3 + $0x130] sm:$0xff] 0.0
        %1309 = vst [vmem:[#allocation3 + $0x148] sm:$0xff] 0.0
        %1310 = vst [vmem:[#allocation3 + $0x160] sm:$0xff] 0.0
        %1311 = vst [vmem:[#allocation3 + $0x178] sm:$0xff] 0.0
        %1312 = vst [vmem:[#allocation3 + $0x190] sm:$0xff] 0.0
        %1313 = vst [vmem:[#allocation3 + $0x1a8] sm:$0xff] 0.0
        %1314 = vst [vmem:[#allocation3 + $0x1c0] sm:$0xff] 0.0
        %1315 = vst [vmem:[#allocation3 + $0x1d8] sm:$0xff] 0.0
        %1316 = vst [vmem:[#allocation3 + $0x8] sm:$0xff] 0.0
        %1317 = vst [vmem:[#allocation3 + $0xf8] sm:$0xff] 0.0
        %s1318 = scalar_lea.vmem [#allocation3], 216
        %1319 = vst [vmem:[%s1318 + $0x8] sm:$0xff] 0.0
        %1320 = vst [vmem:[%s1318 + $0xf8] sm:$0xff] 0.0
        %s1321 = scalar_lea.vmem [#allocation3], 24
        %1322 = vst [vmem:[%s1321 + $0x8] sm:$0xff] %v1260
        %1323 = vst [vmem:[%s1321 + $0x20] sm:$0xff] %v1261
        %1324 = vst [vmem:[%s1321 + $0x38] sm:$0xff] %v1262
        %1325 = vst [vmem:[%s1321 + $0x50] sm:$0xff] %v1263
        %1326 = vst [vmem:[%s1321 + $0x68] sm:$0xff] %v1264
        %1327 = vst [vmem:[%s1321 + $0x80] sm:$0xff] %v1265
        %1328 = vst [vmem:[%s1321 + $0x98] sm:$0xff] %v1266
        %1329 = vst [vmem:[%s1321 + $0xb0] sm:$0xff] %v1267
        %1330 = vst [vmem:[%s1321 + $0xf8] sm:$0xff] %v1268
        %1331 = vst [vmem:[%s1321 + $0x110] sm:$0xff] %v1269
        %1332 = vst [vmem:[%s1321 + $0x128] sm:$0xff] %v1270
        %1333 = vst [vmem:[%s1321 + $0x140] sm:$0xff] %v1271
        %1334 = vst [vmem:[%s1321 + $0x158] sm:$0xff] %v1272
        %1335 = vst [vmem:[%s1321 + $0x170] sm:$0xff] %v1273
        %1336 = vst [vmem:[%s1321 + $0x188] sm:$0xff] %v1274
        %1337 = vst [vmem:[%s1321 + $0x1a0] sm:$0xff] %v1275
        %v1338 = vld [vmem:[#allocation3 + $0x7] sm:$0xff]
        %v1339 = vld [vmem:[#allocation3 + $0x1f] sm:$0xff]
        %v1340 = vld [vmem:[#allocation3 + $0x37] sm:$0xff]
        %v1341 = vld [vmem:[#allocation3 + $0x4f] sm:$0xff]
        %v1342 = vld [vmem:[#allocation3 + $0x67] sm:$0xff]
        %v1343 = vld [vmem:[#allocation3 + $0x7f] sm:$0xff]
        %v1344 = vld [vmem:[#allocation3 + $0x97] sm:$0xff]
        %v1345 = vld [vmem:[#allocation3 + $0xaf] sm:$0xff]
        %v1346 = vld [vmem:[#allocation3 + $0xc7] sm:$0xff]
        %v1347 = vld [vmem:[#allocation3 + $0xdf] sm:$0xff]
        %v1348 = vld [vmem:[#allocation3 + $0xf7] sm:$0xff]
        %v1349 = vld [vmem:[#allocation3 + $0x10f] sm:$0xff]
        %v1350 = vld [vmem:[#allocation3 + $0x127] sm:$0xff]
        %v1351 = vld [vmem:[#allocation3 + $0x13f] sm:$0xff]
        %v1352 = vld [vmem:[#allocation3 + $0x157] sm:$0xff]
        %v1353 = vld [vmem:[#allocation3 + $0x16f] sm:$0xff]
        %v1354 = vld [vmem:[#allocation3 + $0x187] sm:$0xff]
        %v1355 = vld [vmem:[#allocation3 + $0x19f] sm:$0xff]
        %v1356 = vld [vmem:[#allocation3 + $0x1b7] sm:$0xff]
        %v1357 = vld [vmem:[#allocation3 + $0x1cf] sm:$0xff]
        %v1358 = vld [vmem:[#allocation3 + $0x8] sm:$0xff]
        %v1359 = vld [vmem:[#allocation3 + $0x20] sm:$0xff]
        %v1360 = vld [vmem:[#allocation3 + $0x38] sm:$0xff]
        %v1361 = vld [vmem:[#allocation3 + $0x50] sm:$0xff]
        %v1362 = vld [vmem:[#allocation3 + $0x68] sm:$0xff]
        %v1363 = vld [vmem:[#allocation3 + $0x80] sm:$0xff]
        %v1364 = vld [vmem:[#allocation3 + $0x98] sm:$0xff]
        %v1365 = vld [vmem:[#allocation3 + $0xb0] sm:$0xff]
        %v1366 = vld [vmem:[#allocation3 + $0xc8] sm:$0xff]
        %v1367 = vld [vmem:[#allocation3 + $0xe0] sm:$0xff]
        %v1368 = vld [vmem:[#allocation3 + $0xf8] sm:$0xff]
        %v1369 = vld [vmem:[#allocation3 + $0x110] sm:$0xff]
        %v1370 = vld [vmem:[#allocation3 + $0x128] sm:$0xff]
        %v1371 = vld [vmem:[#allocation3 + $0x140] sm:$0xff]
        %v1372 = vld [vmem:[#allocation3 + $0x158] sm:$0xff]
        %v1373 = vld [vmem:[#allocation3 + $0x170] sm:$0xff]
        %v1374 = vld [vmem:[#allocation3 + $0x188] sm:$0xff]
        %v1375 = vld [vmem:[#allocation3 + $0x1a0] sm:$0xff]
        %v1376 = vld [vmem:[#allocation3 + $0x1b8] sm:$0xff]
        %v1377 = vld [vmem:[#allocation3 + $0x1d0] sm:$0xff]
        %v1378 = vld [vmem:[#allocation3 + $0x9] sm:$0xff]
        %v1379 = vld [vmem:[#allocation3 + $0x21] sm:$0xff]
        %v1380 = vld [vmem:[#allocation3 + $0x39] sm:$0xff]
        %v1381 = vld [vmem:[#allocation3 + $0x51] sm:$0xff]
        %v1382 = vld [vmem:[#allocation3 + $0x69] sm:$0xff]
        %v1383 = vld [vmem:[#allocation3 + $0x81] sm:$0xff]
        %v1384 = vld [vmem:[#allocation3 + $0x99] sm:$0xff]
        %v1385 = vld [vmem:[#allocation3 + $0xb1] sm:$0xff]
        %v1386 = vld [vmem:[#allocation3 + $0xc9] sm:$0xff]
        %v1387 = vld [vmem:[#allocation3 + $0xe1] sm:$0xff]
        %v1388 = vld [vmem:[#allocation3 + $0xf9] sm:$0xff]
        %v1389 = vld [vmem:[#allocation3 + $0x111] sm:$0xff]
        %v1390 = vld [vmem:[#allocation3 + $0x129] sm:$0xff]
        %v1391 = vld [vmem:[#allocation3 + $0x141] sm:$0xff]
        %v1392 = vld [vmem:[#allocation3 + $0x159] sm:$0xff]
        %v1393 = vld [vmem:[#allocation3 + $0x171] sm:$0xff]
        %v1394 = vld [vmem:[#allocation3 + $0x189] sm:$0xff]
        %v1395 = vld [vmem:[#allocation3 + $0x1a1] sm:$0xff]
        %v1396 = vld [vmem:[#allocation3 + $0x1b9] sm:$0xff]
        %v1397 = vld [vmem:[#allocation3 + $0x1d1] sm:$0xff]
        %v1398 = vld [vmem:[#allocation9] sm:$0xff]
        %v1399 = vld [vmem:[#allocation9 + $0x8] sm:$0xff]
        %v1400 = vld [vmem:[#allocation9 + $0x10] sm:$0xff]
        %v1401 = vld [vmem:[#allocation9 + $0x18] sm:$0xff]
        %v1402 = vld [vmem:[#allocation9 + $0x20] sm:$0xff]
        %v1403 = vld [vmem:[#allocation9 + $0x28] sm:$0xff]
        %v1404 = vld [vmem:[#allocation9 + $0x30] sm:$0xff]
        %v1405 = vld [vmem:[#allocation9 + $0x38] sm:$0xff]
        %v1406 = vld [vmem:[#allocation9 + $0x40] sm:$0xff]
        %v1407 = vld [vmem:[#allocation9 + $0x48] sm:$0xff]
        %v1408 = vld [vmem:[#allocation9 + $0x50] sm:$0xff]
        %v1409 = vld [vmem:[#allocation9 + $0x58] sm:$0xff]
        %v1410 = vld [vmem:[#allocation9 + $0x60] sm:$0xff]
        %v1411 = vld [vmem:[#allocation9 + $0x68] sm:$0xff]
        %v1412 = vld [vmem:[#allocation9 + $0x70] sm:$0xff]
        %v1413 = vld [vmem:[#allocation9 + $0x78] sm:$0xff]
        %v1414 = vld [vmem:[#allocation9 + $0x80] sm:$0xff]
        %v1415 = vld [vmem:[#allocation9 + $0x88] sm:$0xff]
        %v1416 = vld [vmem:[#allocation9 + $0x90] sm:$0xff]
        %v1417 = vld [vmem:[#allocation9 + $0x98] sm:$0xff]
        %v1418 = vld [vmem:[#allocation9 + $0xa0] sm:$0xff]
        %v1419 = vld [vmem:[#allocation9 + $0xa8] sm:$0xff]
        %v1420 = vld [vmem:[#allocation9 + $0xb0] sm:$0xff]
        %v1421 = vld [vmem:[#allocation9 + $0xb8] sm:$0xff]
        %v1422 = vld [vmem:[#allocation9 + $0xc0] sm:$0xff]
        %v1423 = vld [vmem:[#allocation9 + $0xc8] sm:$0xff]
        %v1424 = vld [vmem:[#allocation9 + $0xd0] sm:$0xff]
        %v1425 = vld [vmem:[#allocation9 + $0xd8] sm:$0xff]
        %v1426 = vld [vmem:[#allocation9 + $0xe0] sm:$0xff]
        %v1427 = vld [vmem:[#allocation9 + $0xe8] sm:$0xff]
        %v1428 = vld [vmem:[#allocation9 + $0xf0] sm:$0xff]
        %v1429 = vld [vmem:[#allocation9 + $0xf8] sm:$0xff]
        %v1430 = vld [vmem:[#allocation9 + $0x100] sm:$0xff]
        %v1431 = vld [vmem:[#allocation9 + $0x108] sm:$0xff]
        %v1432 = vld [vmem:[#allocation9 + $0x110] sm:$0xff]
        %v1433 = vld [vmem:[#allocation9 + $0x118] sm:$0xff]
        %v1434 = vld [vmem:[#allocation9 + $0x120] sm:$0xff]
        %v1435 = vld [vmem:[#allocation9 + $0x128] sm:$0xff]
        %v1436 = vld [vmem:[#allocation9 + $0x130] sm:$0xff]
        %v1437 = vld [vmem:[#allocation9 + $0x138] sm:$0xff]
        %v1438 = vld [vmem:[#allocation9 + $0x140] sm:$0xff]
        %v1439 = vld [vmem:[#allocation9 + $0x148] sm:$0xff]
        %v1440 = vld [vmem:[#allocation9 + $0x150] sm:$0xff]
        %v1441 = vld [vmem:[#allocation9 + $0x158] sm:$0xff]
        %v1442 = vld [vmem:[#allocation9 + $0x160] sm:$0xff]
        %v1443 = vld [vmem:[#allocation9 + $0x168] sm:$0xff]
        %v1444 = vld [vmem:[#allocation9 + $0x170] sm:$0xff]
        %v1445 = vld [vmem:[#allocation9 + $0x178] sm:$0xff]
        %s1446 = scalar_lea.vmem [#allocation9], 384
        %v1447 = vld [vmem:[%s1446] sm:$0xff]
        %v1448 = vld [vmem:[%s1446 + $0x8] sm:$0xff]
        %v1449 = vld [vmem:[%s1446 + $0x10] sm:$0xff]
        %v1450 = vld [vmem:[%s1446 + $0x18] sm:$0xff]
        %v1451 = vld [vmem:[%s1446 + $0x20] sm:$0xff]
        %v1452 = vld [vmem:[%s1446 + $0x28] sm:$0xff]
        %v1453 = vld [vmem:[%s1446 + $0x30] sm:$0xff]
        %v1454 = vld [vmem:[%s1446 + $0x38] sm:$0xff]
        %v1455 = vld [vmem:[%s1446 + $0x40] sm:$0xff]
        %v1456 = vld [vmem:[%s1446 + $0x48] sm:$0xff]
        %v1457 = vld [vmem:[%s1446 + $0x50] sm:$0xff]
        %v1458 = vld [vmem:[%s1446 + $0x58] sm:$0xff]
        %v1459 = vld [vmem:[%s1446 + $0x60] sm:$0xff]
        %v1460 = vld [vmem:[%s1446 + $0x68] sm:$0xff]
        %v1461 = vld [vmem:[%s1446 + $0x70] sm:$0xff]
        %v1462 = vld [vmem:[%s1446 + $0x78] sm:$0xff]
        %v1463 = vld [vmem:[%s1446 + $0x80] sm:$0xff]
        %v1464 = vld [vmem:[%s1446 + $0x88] sm:$0xff]
        %v1465 = vld [vmem:[%s1446 + $0x90] sm:$0xff]
        %v1466 = vld [vmem:[%s1446 + $0x98] sm:$0xff]
        %v1467 = vld [vmem:[%s1446 + $0xa0] sm:$0xff]
        %v1468 = vld [vmem:[%s1446 + $0xa8] sm:$0xff]
        %v1469 = vld [vmem:[%s1446 + $0xb0] sm:$0xff]
        %v1470 = vld [vmem:[%s1446 + $0xb8] sm:$0xff]
        %v1471 = vld [vmem:[%s1446 + $0xc0] sm:$0xff]
        %v1472 = vld [vmem:[%s1446 + $0xc8] sm:$0xff]
        %v1473 = vld [vmem:[%s1446 + $0xd0] sm:$0xff]
        %v1474 = vld [vmem:[%s1446 + $0xd8] sm:$0xff]
        %v1475 = vld [vmem:[%s1446 + $0xe0] sm:$0xff]
        %v1476 = vld [vmem:[%s1446 + $0xe8] sm:$0xff]
        %v1477 = vld [vmem:[%s1446 + $0xf0] sm:$0xff]
        %v1478 = vld [vmem:[%s1446 + $0xf8] sm:$0xff]
        %v1479 = vld [vmem:[%s1446 + $0x100] sm:$0xff]
        %v1480 = vld [vmem:[%s1446 + $0x108] sm:$0xff]
        %v1481 = vld [vmem:[%s1446 + $0x110] sm:$0xff]
        %v1482 = vld [vmem:[%s1446 + $0x118] sm:$0xff]
        %v1483 = vld [vmem:[%s1446 + $0x120] sm:$0xff]
        %v1484 = vld [vmem:[%s1446 + $0x128] sm:$0xff]
        %v1485 = vld [vmem:[%s1446 + $0x130] sm:$0xff]
        %v1486 = vld [vmem:[%s1446 + $0x138] sm:$0xff]
        %v1487 = vld [vmem:[%s1446 + $0x140] sm:$0xff]
        %v1488 = vld [vmem:[%s1446 + $0x148] sm:$0xff]
        %v1489 = vld [vmem:[%s1446 + $0x150] sm:$0xff]
        %v1490 = vld [vmem:[%s1446 + $0x158] sm:$0xff]
        %v1491 = vld [vmem:[%s1446 + $0x160] sm:$0xff]
        %v1492 = vld [vmem:[%s1446 + $0x168] sm:$0xff]
        %v1493 = vld [vmem:[%s1446 + $0x170] sm:$0xff]
        %v1494 = vld [vmem:[%s1446 + $0x178] sm:$0xff]
        %1495 = vmatpush.msra.mxu0 %v1462
        %1496 = vmatpush.msra.mxu0 %v1461
        %1497 = vmatpush.msra.mxu0 %v1460
        %1498 = vmatpush.msra.mxu0 %v1459
        %1499 = vmatpush.msra.mxu0 %v1458
        %1500 = vmatpush.msra.mxu0 %v1457
        %1501 = vmatpush.msra.mxu0 %v1456
        %1502 = vmatpush.msra.mxu0 %v1455
        %1503 = vmatpush.msra.mxu0 %v1454
        %1504 = vmatpush.msra.mxu0 %v1453
        %1505 = vmatpush.msra.mxu0 %v1452
        %1506 = vmatpush.msra.mxu0 %v1451
        %1507 = vmatpush.msra.mxu0 %v1450
        %1508 = vmatpush.msra.mxu0 %v1449
        %1509 = vmatpush.msra.mxu0 %v1448
        %1510 = vmatpush.msra.mxu0 %v1447
        %1511 = vmatmul.f32.gmra.mxu0 %v1339
        %v1512 = vpop.f32.mrf.mxu0
        %v1513 = vadd.f32 0.0, %v1512
        %1514 = vmatmul.f32.gmra.mxu0 %v1340
        %v1515 = vpop.f32.mrf.mxu0
        %v1516 = vadd.f32 0.0, %v1515
        %1517 = vmatmul.f32.gmra.mxu0 %v1341
        %v1518 = vpop.f32.mrf.mxu0
        %v1519 = vadd.f32 0.0, %v1518
        %1520 = vmatmul.f32.gmra.mxu0 %v1342
        %v1521 = vpop.f32.mrf.mxu0
        %v1522 = vadd.f32 0.0, %v1521
        %1523 = vmatmul.f32.gmra.mxu0 %v1343
        %v1524 = vpop.f32.mrf.mxu0
        %v1525 = vadd.f32 0.0, %v1524
        %1526 = vmatmul.f32.gmra.mxu0 %v1344
        %v1527 = vpop.f32.mrf.mxu0
        %v1528 = vadd.f32 0.0, %v1527
        %1529 = vmatmul.f32.gmra.mxu0 %v1345
        %v1530 = vpop.f32.mrf.mxu0
        %v1531 = vadd.f32 0.0, %v1530
        %1532 = vmatmul.f32.gmra.mxu0 %v1346
        %v1533 = vpop.f32.mrf.mxu0
        %v1534 = vadd.f32 0.0, %v1533
        %1535 = vmatmul.f32.gmra.mxu0 %v1349
        %v1536 = vpop.f32.mrf.mxu0
        %v1537 = vadd.f32 0.0, %v1536
        %1538 = vmatmul.f32.gmra.mxu0 %v1350
        %v1539 = vpop.f32.mrf.mxu0
        %v1540 = vadd.f32 0.0, %v1539
        %1541 = vmatmul.f32.gmra.mxu0 %v1351
        %v1542 = vpop.f32.mrf.mxu0
        %v1543 = vadd.f32 0.0, %v1542
        %1544 = vmatmul.f32.gmra.mxu0 %v1352
        %v1545 = vpop.f32.mrf.mxu0
        %v1546 = vadd.f32 0.0, %v1545
        %1547 = vmatmul.f32.gmra.mxu0 %v1353
        %v1548 = vpop.f32.mrf.mxu0
        %v1549 = vadd.f32 0.0, %v1548
        %1550 = vmatmul.f32.gmra.mxu0 %v1354
        %v1551 = vpop.f32.mrf.mxu0
        %v1552 = vadd.f32 0.0, %v1551
        %1553 = vmatmul.f32.gmra.mxu0 %v1355
        %v1554 = vpop.f32.mrf.mxu0
        %v1555 = vadd.f32 0.0, %v1554
        %1556 = vmatmul.f32.gmra.mxu0 %v1356
        %v1557 = vpop.f32.mrf.mxu0
        %v1558 = vadd.f32 0.0, %v1557
        %1559 = vdwg.mxu0
        %1560 = vmatpush.msra.mxu0 %v1478
        %1561 = vmatpush.msra.mxu0 %v1477
        %1562 = vmatpush.msra.mxu0 %v1476
        %1563 = vmatpush.msra.mxu0 %v1475
        %1564 = vmatpush.msra.mxu0 %v1474
        %1565 = vmatpush.msra.mxu0 %v1473
        %1566 = vmatpush.msra.mxu0 %v1472
        %1567 = vmatpush.msra.mxu0 %v1471
        %1568 = vmatpush.msra.mxu0 %v1470
        %1569 = vmatpush.msra.mxu0 %v1469
        %1570 = vmatpush.msra.mxu0 %v1468
        %1571 = vmatpush.msra.mxu0 %v1467
        %1572 = vmatpush.msra.mxu0 %v1466
        %1573 = vmatpush.msra.mxu0 %v1465
        %1574 = vmatpush.msra.mxu0 %v1464
        %1575 = vmatpush.msra.mxu0 %v1463
        %1576 = vmatmul.f32.gmra.mxu0 %v1359
        %v1577 = vpop.f32.mrf.mxu0
        %v1578 = vadd.f32 %v1513, %v1577
        %1579 = vmatmul.f32.gmra.mxu0 %v1360
        %v1580 = vpop.f32.mrf.mxu0
        %v1581 = vadd.f32 %v1516, %v1580
        %1582 = vmatmul.f32.gmra.mxu0 %v1361
        %v1583 = vpop.f32.mrf.mxu0
        %v1584 = vadd.f32 %v1519, %v1583
        %1585 = vmatmul.f32.gmra.mxu0 %v1362
        %v1586 = vpop.f32.mrf.mxu0
        %v1587 = vadd.f32 %v1522, %v1586
        %1588 = vmatmul.f32.gmra.mxu0 %v1363
        %v1589 = vpop.f32.mrf.mxu0
        %v1590 = vadd.f32 %v1525, %v1589
        %1591 = vmatmul.f32.gmra.mxu0 %v1364
        %v1592 = vpop.f32.mrf.mxu0
        %v1593 = vadd.f32 %v1528, %v1592
        %1594 = vmatmul.f32.gmra.mxu0 %v1365
        %v1595 = vpop.f32.mrf.mxu0
        %v1596 = vadd.f32 %v1531, %v1595
        %1597 = vmatmul.f32.gmra.mxu0 %v1366
        %v1598 = vpop.f32.mrf.mxu0
        %v1599 = vadd.f32 %v1534, %v1598
        %1600 = vmatmul.f32.gmra.mxu0 %v1369
        %v1601 = vpop.f32.mrf.mxu0
        %v1602 = vadd.f32 %v1537, %v1601
        %1603 = vmatmul.f32.gmra.mxu0 %v1370
        %v1604 = vpop.f32.mrf.mxu0
        %v1605 = vadd.f32 %v1540, %v1604
        %1606 = vmatmul.f32.gmra.mxu0 %v1371
        %v1607 = vpop.f32.mrf.mxu0
        %v1608 = vadd.f32 %v1543, %v1607
        %1609 = vmatmul.f32.gmra.mxu0 %v1372
        %v1610 = vpop.f32.mrf.mxu0
        %v1611 = vadd.f32 %v1546, %v1610
        %1612 = vmatmul.f32.gmra.mxu0 %v1373
        %v1613 = vpop.f32.mrf.mxu0
        %v1614 = vadd.f32 %v1549, %v1613
        %1615 = vmatmul.f32.gmra.mxu0 %v1374
        %v1616 = vpop.f32.mrf.mxu0
        %v1617 = vadd.f32 %v1552, %v1616
        %1618 = vmatmul.f32.gmra.mxu0 %v1375
        %v1619 = vpop.f32.mrf.mxu0
        %v1620 = vadd.f32 %v1555, %v1619
        %1621 = vmatmul.f32.gmra.mxu0 %v1376
        %v1622 = vpop.f32.mrf.mxu0
        %v1623 = vadd.f32 %v1558, %v1622
        %1624 = vdwg.mxu0
        %1625 = vmatpush.msra.mxu0 %v1494
        %1626 = vmatpush.msra.mxu0 %v1493
        %1627 = vmatpush.msra.mxu0 %v1492
        %1628 = vmatpush.msra.mxu0 %v1491
        %1629 = vmatpush.msra.mxu0 %v1490
        %1630 = vmatpush.msra.mxu0 %v1489
        %1631 = vmatpush.msra.mxu0 %v1488
        %1632 = vmatpush.msra.mxu0 %v1487
        %1633 = vmatpush.msra.mxu0 %v1486
        %1634 = vmatpush.msra.mxu0 %v1485
        %1635 = vmatpush.msra.mxu0 %v1484
        %1636 = vmatpush.msra.mxu0 %v1483
        %1637 = vmatpush.msra.mxu0 %v1482
        %1638 = vmatpush.msra.mxu0 %v1481
        %1639 = vmatpush.msra.mxu0 %v1480
        %1640 = vmatpush.msra.mxu0 %v1479
        %1641 = vmatmul.f32.gmra.mxu0 %v1379
        %v1642 = vpop.f32.mrf.mxu0
        %v1643 = vadd.f32 %v1578, %v1642
        %1644 = vmatmul.f32.gmra.mxu0 %v1380
        %v1645 = vpop.f32.mrf.mxu0
        %v1646 = vadd.f32 %v1581, %v1645
        %1647 = vmatmul.f32.gmra.mxu0 %v1381
        %v1648 = vpop.f32.mrf.mxu0
        %v1649 = vadd.f32 %v1584, %v1648
        %1650 = vmatmul.f32.gmra.mxu0 %v1382
        %v1651 = vpop.f32.mrf.mxu0
        %v1652 = vadd.f32 %v1587, %v1651
        %1653 = vmatmul.f32.gmra.mxu0 %v1383
        %v1654 = vpop.f32.mrf.mxu0
        %v1655 = vadd.f32 %v1590, %v1654
        %1656 = vmatmul.f32.gmra.mxu0 %v1384
        %v1657 = vpop.f32.mrf.mxu0
        %v1658 = vadd.f32 %v1593, %v1657
        %1659 = vmatmul.f32.gmra.mxu0 %v1385
        %v1660 = vpop.f32.mrf.mxu0
        %v1661 = vadd.f32 %v1596, %v1660
        %1662 = vmatmul.f32.gmra.mxu0 %v1386
        %v1663 = vpop.f32.mrf.mxu0
        %v1664 = vadd.f32 %v1599, %v1663
        %1665 = vmatmul.f32.gmra.mxu0 %v1389
        %v1666 = vpop.f32.mrf.mxu0
        %v1667 = vadd.f32 %v1602, %v1666
        %1668 = vmatmul.f32.gmra.mxu0 %v1390
        %v1669 = vpop.f32.mrf.mxu0
        %v1670 = vadd.f32 %v1605, %v1669
        %1671 = vmatmul.f32.gmra.mxu0 %v1391
        %v1672 = vpop.f32.mrf.mxu0
        %v1673 = vadd.f32 %v1608, %v1672
        %1674 = vmatmul.f32.gmra.mxu0 %v1392
        %v1675 = vpop.f32.mrf.mxu0
        %v1676 = vadd.f32 %v1611, %v1675
        %1677 = vmatmul.f32.gmra.mxu0 %v1393
        %v1678 = vpop.f32.mrf.mxu0
        %v1679 = vadd.f32 %v1614, %v1678
        %1680 = vmatmul.f32.gmra.mxu0 %v1394
        %v1681 = vpop.f32.mrf.mxu0
        %v1682 = vadd.f32 %v1617, %v1681
        %1683 = vmatmul.f32.gmra.mxu0 %v1395
        %v1684 = vpop.f32.mrf.mxu0
        %v1685 = vadd.f32 %v1620, %v1684
        %1686 = vmatmul.f32.gmra.mxu0 %v1396
        %v1687 = vpop.f32.mrf.mxu0
        %v1688 = vadd.f32 %v1623, %v1687
        %1689 = vdwg.mxu0
        %1690 = vmatpush.msra.mxu0 %v1413
        %1691 = vmatpush.msra.mxu0 %v1412
        %1692 = vmatpush.msra.mxu0 %v1411
        %1693 = vmatpush.msra.mxu0 %v1410
        %1694 = vmatpush.msra.mxu0 %v1409
        %1695 = vmatpush.msra.mxu0 %v1408
        %1696 = vmatpush.msra.mxu0 %v1407
        %1697 = vmatpush.msra.mxu0 %v1406
        %1698 = vmatpush.msra.mxu0 %v1405
        %1699 = vmatpush.msra.mxu0 %v1404
        %1700 = vmatpush.msra.mxu0 %v1403
        %1701 = vmatpush.msra.mxu0 %v1402
        %1702 = vmatpush.msra.mxu0 %v1401
        %1703 = vmatpush.msra.mxu0 %v1400
        %1704 = vmatpush.msra.mxu0 %v1399
        %1705 = vmatpush.msra.mxu0 %v1398
        %1706 = vmatmul.f32.gmra.mxu0 %v1338
        %v1707 = vpop.f32.mrf.mxu0
        %v1708 = vadd.f32 %v1643, %v1707
        %1709 = vmatmul.f32.gmra.mxu0 %v1339
        %v1710 = vpop.f32.mrf.mxu0
        %v1711 = vadd.f32 %v1646, %v1710
        %1712 = vmatmul.f32.gmra.mxu0 %v1340
        %v1713 = vpop.f32.mrf.mxu0
        %v1714 = vadd.f32 %v1649, %v1713
        %1715 = vmatmul.f32.gmra.mxu0 %v1341
        %v1716 = vpop.f32.mrf.mxu0
        %v1717 = vadd.f32 %v1652, %v1716
        %1718 = vmatmul.f32.gmra.mxu0 %v1342
        %v1719 = vpop.f32.mrf.mxu0
        %v1720 = vadd.f32 %v1655, %v1719
        %1721 = vmatmul.f32.gmra.mxu0 %v1343
        %v1722 = vpop.f32.mrf.mxu0
        %v1723 = vadd.f32 %v1658, %v1722
        %1724 = vmatmul.f32.gmra.mxu0 %v1344
        %v1725 = vpop.f32.mrf.mxu0
        %v1726 = vadd.f32 %v1661, %v1725
        %1727 = vmatmul.f32.gmra.mxu0 %v1345
        %v1728 = vpop.f32.mrf.mxu0
        %v1729 = vadd.f32 %v1664, %v1728
        %1730 = vmatmul.f32.gmra.mxu0 %v1348
        %v1731 = vpop.f32.mrf.mxu0
        %v1732 = vadd.f32 %v1667, %v1731
        %1733 = vmatmul.f32.gmra.mxu0 %v1349
        %v1734 = vpop.f32.mrf.mxu0
        %v1735 = vadd.f32 %v1670, %v1734
        %1736 = vmatmul.f32.gmra.mxu0 %v1350
        %v1737 = vpop.f32.mrf.mxu0
        %v1738 = vadd.f32 %v1673, %v1737
        %1739 = vmatmul.f32.gmra.mxu0 %v1351
        %v1740 = vpop.f32.mrf.mxu0
        %v1741 = vadd.f32 %v1676, %v1740
        %1742 = vmatmul.f32.gmra.mxu0 %v1352
        %v1743 = vpop.f32.mrf.mxu0
        %v1744 = vadd.f32 %v1679, %v1743
        %1745 = vmatmul.f32.gmra.mxu0 %v1353
        %v1746 = vpop.f32.mrf.mxu0
        %v1747 = vadd.f32 %v1682, %v1746
        %1748 = vmatmul.f32.gmra.mxu0 %v1354
        %v1749 = vpop.f32.mrf.mxu0
        %v1750 = vadd.f32 %v1685, %v1749
        %1751 = vmatmul.f32.gmra.mxu0 %v1355
        %v1752 = vpop.f32.mrf.mxu0
        %v1753 = vadd.f32 %v1688, %v1752
        %1754 = vdwg.mxu0
        %1755 = vmatpush.msra.mxu0 %v1429
        %1756 = vmatpush.msra.mxu0 %v1428
        %1757 = vmatpush.msra.mxu0 %v1427
        %1758 = vmatpush.msra.mxu0 %v1426
        %1759 = vmatpush.msra.mxu0 %v1425
        %1760 = vmatpush.msra.mxu0 %v1424
        %1761 = vmatpush.msra.mxu0 %v1423
        %1762 = vmatpush.msra.mxu0 %v1422
        %1763 = vmatpush.msra.mxu0 %v1421
        %1764 = vmatpush.msra.mxu0 %v1420
        %1765 = vmatpush.msra.mxu0 %v1419
        %1766 = vmatpush.msra.mxu0 %v1418
        %1767 = vmatpush.msra.mxu0 %v1417
        %1768 = vmatpush.msra.mxu0 %v1416
        %1769 = vmatpush.msra.mxu0 %v1415
        %1770 = vmatpush.msra.mxu0 %v1414
        %1771 = vmatmul.f32.gmra.mxu0 %v1358
        %v1772 = vpop.f32.mrf.mxu0
        %v1773 = vadd.f32 %v1708, %v1772
        %1774 = vmatmul.f32.gmra.mxu0 %v1359
        %v1775 = vpop.f32.mrf.mxu0
        %v1776 = vadd.f32 %v1711, %v1775
        %1777 = vmatmul.f32.gmra.mxu0 %v1360
        %v1778 = vpop.f32.mrf.mxu0
        %v1779 = vadd.f32 %v1714, %v1778
        %1780 = vmatmul.f32.gmra.mxu0 %v1361
        %v1781 = vpop.f32.mrf.mxu0
        %v1782 = vadd.f32 %v1717, %v1781
        %1783 = vmatmul.f32.gmra.mxu0 %v1362
        %v1784 = vpop.f32.mrf.mxu0
        %v1785 = vadd.f32 %v1720, %v1784
        %1786 = vmatmul.f32.gmra.mxu0 %v1363
        %v1787 = vpop.f32.mrf.mxu0
        %v1788 = vadd.f32 %v1723, %v1787
        %1789 = vmatmul.f32.gmra.mxu0 %v1364
        %v1790 = vpop.f32.mrf.mxu0
        %v1791 = vadd.f32 %v1726, %v1790
        %1792 = vmatmul.f32.gmra.mxu0 %v1365
        %v1793 = vpop.f32.mrf.mxu0
        %v1794 = vadd.f32 %v1729, %v1793
        %1795 = vmatmul.f32.gmra.mxu0 %v1368
        %v1796 = vpop.f32.mrf.mxu0
        %v1797 = vadd.f32 %v1732, %v1796
        %1798 = vmatmul.f32.gmra.mxu0 %v1369
        %v1799 = vpop.f32.mrf.mxu0
        %v1800 = vadd.f32 %v1735, %v1799
        %1801 = vmatmul.f32.gmra.mxu0 %v1370
        %v1802 = vpop.f32.mrf.mxu0
        %v1803 = vadd.f32 %v1738, %v1802
        %1804 = vmatmul.f32.gmra.mxu0 %v1371
        %v1805 = vpop.f32.mrf.mxu0
        %v1806 = vadd.f32 %v1741, %v1805
        %1807 = vmatmul.f32.gmra.mxu0 %v1372
        %v1808 = vpop.f32.mrf.mxu0
        %v1809 = vadd.f32 %v1744, %v1808
        %1810 = vmatmul.f32.gmra.mxu0 %v1373
        %v1811 = vpop.f32.mrf.mxu0
        %v1812 = vadd.f32 %v1747, %v1811
        %1813 = vmatmul.f32.gmra.mxu0 %v1374
        %v1814 = vpop.f32.mrf.mxu0
        %v1815 = vadd.f32 %v1750, %v1814
        %1816 = vmatmul.f32.gmra.mxu0 %v1375
        %v1817 = vpop.f32.mrf.mxu0
        %v1818 = vadd.f32 %v1753, %v1817
        %1819 = vdwg.mxu0
        %1820 = vmatpush.msra.mxu0 %v1445
        %1821 = vmatpush.msra.mxu0 %v1444
        %1822 = vmatpush.msra.mxu0 %v1443
        %1823 = vmatpush.msra.mxu0 %v1442
        %1824 = vmatpush.msra.mxu0 %v1441
        %1825 = vmatpush.msra.mxu0 %v1440
        %1826 = vmatpush.msra.mxu0 %v1439
        %1827 = vmatpush.msra.mxu0 %v1438
        %1828 = vmatpush.msra.mxu0 %v1437
        %1829 = vmatpush.msra.mxu0 %v1436
        %1830 = vmatpush.msra.mxu0 %v1435
        %1831 = vmatpush.msra.mxu0 %v1434
        %1832 = vmatpush.msra.mxu0 %v1433
        %1833 = vmatpush.msra.mxu0 %v1432
        %1834 = vmatpush.msra.mxu0 %v1431
        %1835 = vmatpush.msra.mxu0 %v1430
        %1836 = vmatmul.f32.gmra.mxu0 %v1378
        %v1837 = vpop.f32.mrf.mxu0
        %v1838 = vadd.f32 %v1773, %v1837
        %1839 = vmatmul.f32.gmra.mxu0 %v1379
        %v1840 = vpop.f32.mrf.mxu0
        %v1841 = vadd.f32 %v1776, %v1840
        %1842 = vmatmul.f32.gmra.mxu0 %v1380
        %v1843 = vpop.f32.mrf.mxu0
        %v1844 = vadd.f32 %v1779, %v1843
        %1845 = vmatmul.f32.gmra.mxu0 %v1381
        %v1846 = vpop.f32.mrf.mxu0
        %v1847 = vadd.f32 %v1782, %v1846
        %1848 = vmatmul.f32.gmra.mxu0 %v1382
        %v1849 = vpop.f32.mrf.mxu0
        %v1850 = vadd.f32 %v1785, %v1849
        %1851 = vmatmul.f32.gmra.mxu0 %v1383
        %v1852 = vpop.f32.mrf.mxu0
        %v1853 = vadd.f32 %v1788, %v1852
        %1854 = vmatmul.f32.gmra.mxu0 %v1384
        %v1855 = vpop.f32.mrf.mxu0
        %v1856 = vadd.f32 %v1791, %v1855
        %1857 = vmatmul.f32.gmra.mxu0 %v1385
        %v1858 = vpop.f32.mrf.mxu0
        %v1859 = vadd.f32 %v1794, %v1858
        %1860 = vmatmul.f32.gmra.mxu0 %v1388
        %v1861 = vpop.f32.mrf.mxu0
        %v1862 = vadd.f32 %v1797, %v1861
        %1863 = vmatmul.f32.gmra.mxu0 %v1389
        %v1864 = vpop.f32.mrf.mxu0
        %v1865 = vadd.f32 %v1800, %v1864
        %1866 = vmatmul.f32.gmra.mxu0 %v1390
        %v1867 = vpop.f32.mrf.mxu0
        %v1868 = vadd.f32 %v1803, %v1867
        %1869 = vmatmul.f32.gmra.mxu0 %v1391
        %v1870 = vpop.f32.mrf.mxu0
        %v1871 = vadd.f32 %v1806, %v1870
        %1872 = vmatmul.f32.gmra.mxu0 %v1392
        %v1873 = vpop.f32.mrf.mxu0
        %v1874 = vadd.f32 %v1809, %v1873
        %1875 = vmatmul.f32.gmra.mxu0 %v1393
        %v1876 = vpop.f32.mrf.mxu0
        %v1877 = vadd.f32 %v1812, %v1876
        %1878 = vmatmul.f32.gmra.mxu0 %v1394
        %v1879 = vpop.f32.mrf.mxu0
        %v1880 = vadd.f32 %v1815, %v1879
        %1881 = vmatmul.f32.gmra.mxu0 %v1395
        %v1882 = vpop.f32.mrf.mxu0
        %v1883 = vadd.f32 %v1818, %v1882
        %1884 = vdwg.mxu0
        %s1885 = scalar_lea.vmem [#allocation9], 768
        %v1886 = vld [vmem:[%s1885] sm:$0xff]
        %v1887 = vld [vmem:[%s1885 + $0x8] sm:$0xff]
        %v1888 = vld [vmem:[%s1885 + $0x10] sm:$0xff]
        %v1889 = vld [vmem:[%s1885 + $0x18] sm:$0xff]
        %v1890 = vld [vmem:[%s1885 + $0x20] sm:$0xff]
        %v1891 = vld [vmem:[%s1885 + $0x28] sm:$0xff]
        %v1892 = vld [vmem:[%s1885 + $0x30] sm:$0xff]
        %v1893 = vld [vmem:[%s1885 + $0x38] sm:$0xff]
        %v1894 = vld [vmem:[%s1885 + $0x40] sm:$0xff]
        %v1895 = vld [vmem:[%s1885 + $0x48] sm:$0xff]
        %v1896 = vld [vmem:[%s1885 + $0x50] sm:$0xff]
        %v1897 = vld [vmem:[%s1885 + $0x58] sm:$0xff]
        %v1898 = vld [vmem:[%s1885 + $0x60] sm:$0xff]
        %v1899 = vld [vmem:[%s1885 + $0x68] sm:$0xff]
        %v1900 = vld [vmem:[%s1885 + $0x70] sm:$0xff]
        %v1901 = vld [vmem:[%s1885 + $0x78] sm:$0xff]
        %v1902 = vld [vmem:[%s1885 + $0x80] sm:$0xff]
        %v1903 = vld [vmem:[%s1885 + $0x88] sm:$0xff]
        %v1904 = vld [vmem:[%s1885 + $0x90] sm:$0xff]
        %v1905 = vld [vmem:[%s1885 + $0x98] sm:$0xff]
        %v1906 = vld [vmem:[%s1885 + $0xa0] sm:$0xff]
        %v1907 = vld [vmem:[%s1885 + $0xa8] sm:$0xff]
        %v1908 = vld [vmem:[%s1885 + $0xb0] sm:$0xff]
        %v1909 = vld [vmem:[%s1885 + $0xb8] sm:$0xff]
        %v1910 = vld [vmem:[%s1885 + $0xc0] sm:$0xff]
        %v1911 = vld [vmem:[%s1885 + $0xc8] sm:$0xff]
        %v1912 = vld [vmem:[%s1885 + $0xd0] sm:$0xff]
        %v1913 = vld [vmem:[%s1885 + $0xd8] sm:$0xff]
        %v1914 = vld [vmem:[%s1885 + $0xe0] sm:$0xff]
        %v1915 = vld [vmem:[%s1885 + $0xe8] sm:$0xff]
        %v1916 = vld [vmem:[%s1885 + $0xf0] sm:$0xff]
        %v1917 = vld [vmem:[%s1885 + $0xf8] sm:$0xff]
        %v1918 = vld [vmem:[%s1885 + $0x100] sm:$0xff]
        %v1919 = vld [vmem:[%s1885 + $0x108] sm:$0xff]
        %v1920 = vld [vmem:[%s1885 + $0x110] sm:$0xff]
        %v1921 = vld [vmem:[%s1885 + $0x118] sm:$0xff]
        %v1922 = vld [vmem:[%s1885 + $0x120] sm:$0xff]
        %v1923 = vld [vmem:[%s1885 + $0x128] sm:$0xff]
        %v1924 = vld [vmem:[%s1885 + $0x130] sm:$0xff]
        %v1925 = vld [vmem:[%s1885 + $0x138] sm:$0xff]
        %v1926 = vld [vmem:[%s1885 + $0x140] sm:$0xff]
        %v1927 = vld [vmem:[%s1885 + $0x148] sm:$0xff]
        %v1928 = vld [vmem:[%s1885 + $0x150] sm:$0xff]
        %v1929 = vld [vmem:[%s1885 + $0x158] sm:$0xff]
        %v1930 = vld [vmem:[%s1885 + $0x160] sm:$0xff]
        %v1931 = vld [vmem:[%s1885 + $0x168] sm:$0xff]
        %v1932 = vld [vmem:[%s1885 + $0x170] sm:$0xff]
        %v1933 = vld [vmem:[%s1885 + $0x178] sm:$0xff]
        %1934 = vmatpush.msra.mxu0 %v1901
        %1935 = vmatpush.msra.mxu0 %v1900
        %1936 = vmatpush.msra.mxu0 %v1899
        %1937 = vmatpush.msra.mxu0 %v1898
        %1938 = vmatpush.msra.mxu0 %v1897
        %1939 = vmatpush.msra.mxu0 %v1896
        %1940 = vmatpush.msra.mxu0 %v1895
        %1941 = vmatpush.msra.mxu0 %v1894
        %1942 = vmatpush.msra.mxu0 %v1893
        %1943 = vmatpush.msra.mxu0 %v1892
        %1944 = vmatpush.msra.mxu0 %v1891
        %1945 = vmatpush.msra.mxu0 %v1890
        %1946 = vmatpush.msra.mxu0 %v1889
        %1947 = vmatpush.msra.mxu0 %v1888
        %1948 = vmatpush.msra.mxu0 %v1887
        %1949 = vmatpush.msra.mxu0 %v1886
        %1950 = vmatmul.f32.gmra.mxu0 %v1340
        %v1951 = vpop.f32.mrf.mxu0
        %v1952 = vadd.f32 0.0, %v1951
        %1953 = vmatmul.f32.gmra.mxu0 %v1341
        %v1954 = vpop.f32.mrf.mxu0
        %v1955 = vadd.f32 0.0, %v1954
        %1956 = vmatmul.f32.gmra.mxu0 %v1342
        %v1957 = vpop.f32.mrf.mxu0
        %v1958 = vadd.f32 0.0, %v1957
        %1959 = vmatmul.f32.gmra.mxu0 %v1343
        %v1960 = vpop.f32.mrf.mxu0
        %v1961 = vadd.f32 0.0, %v1960
        %1962 = vmatmul.f32.gmra.mxu0 %v1344
        %v1963 = vpop.f32.mrf.mxu0
        %v1964 = vadd.f32 0.0, %v1963
        %1965 = vmatmul.f32.gmra.mxu0 %v1345
        %v1966 = vpop.f32.mrf.mxu0
        %v1967 = vadd.f32 0.0, %v1966
        %1968 = vmatmul.f32.gmra.mxu0 %v1346
        %v1969 = vpop.f32.mrf.mxu0
        %v1970 = vadd.f32 0.0, %v1969
        %1971 = vmatmul.f32.gmra.mxu0 %v1347
        %v1972 = vpop.f32.mrf.mxu0
        %v1973 = vadd.f32 0.0, %v1972
        %1974 = vmatmul.f32.gmra.mxu0 %v1350
        %v1975 = vpop.f32.mrf.mxu0
        %v1976 = vadd.f32 0.0, %v1975
        %1977 = vmatmul.f32.gmra.mxu0 %v1351
        %v1978 = vpop.f32.mrf.mxu0
        %v1979 = vadd.f32 0.0, %v1978
        %1980 = vmatmul.f32.gmra.mxu0 %v1352
        %v1981 = vpop.f32.mrf.mxu0
        %v1982 = vadd.f32 0.0, %v1981
        %1983 = vmatmul.f32.gmra.mxu0 %v1353
        %v1984 = vpop.f32.mrf.mxu0
        %v1985 = vadd.f32 0.0, %v1984
        %1986 = vmatmul.f32.gmra.mxu0 %v1354
        %v1987 = vpop.f32.mrf.mxu0
        %v1988 = vadd.f32 0.0, %v1987
        %1989 = vmatmul.f32.gmra.mxu0 %v1355
        %v1990 = vpop.f32.mrf.mxu0
        %v1991 = vadd.f32 0.0, %v1990
        %1992 = vmatmul.f32.gmra.mxu0 %v1356
        %v1993 = vpop.f32.mrf.mxu0
        %v1994 = vadd.f32 0.0, %v1993
        %1995 = vmatmul.f32.gmra.mxu0 %v1357
        %v1996 = vpop.f32.mrf.mxu0
        %v1997 = vadd.f32 0.0, %v1996
        %1998 = vdwg.mxu0
        %1999 = vmatpush.msra.mxu0 %v1917
        %2000 = vmatpush.msra.mxu0 %v1916
        %2001 = vmatpush.msra.mxu0 %v1915
        %2002 = vmatpush.msra.mxu0 %v1914
        %2003 = vmatpush.msra.mxu0 %v1913
        %2004 = vmatpush.msra.mxu0 %v1912
        %2005 = vmatpush.msra.mxu0 %v1911
        %2006 = vmatpush.msra.mxu0 %v1910
        %2007 = vmatpush.msra.mxu0 %v1909
        %2008 = vmatpush.msra.mxu0 %v1908
        %2009 = vmatpush.msra.mxu0 %v1907
        %2010 = vmatpush.msra.mxu0 %v1906
        %2011 = vmatpush.msra.mxu0 %v1905
        %2012 = vmatpush.msra.mxu0 %v1904
        %2013 = vmatpush.msra.mxu0 %v1903
        %2014 = vmatpush.msra.mxu0 %v1902
        %2015 = vmatmul.f32.gmra.mxu0 %v1360
        %v2016 = vpop.f32.mrf.mxu0
        %v2017 = vadd.f32 %v1952, %v2016
        %2018 = vmatmul.f32.gmra.mxu0 %v1361
        %v2019 = vpop.f32.mrf.mxu0
        %v2020 = vadd.f32 %v1955, %v2019
        %2021 = vmatmul.f32.gmra.mxu0 %v1362
        %v2022 = vpop.f32.mrf.mxu0
        %v2023 = vadd.f32 %v1958, %v2022
        %2024 = vmatmul.f32.gmra.mxu0 %v1363
        %v2025 = vpop.f32.mrf.mxu0
        %v2026 = vadd.f32 %v1961, %v2025
        %2027 = vmatmul.f32.gmra.mxu0 %v1364
        %v2028 = vpop.f32.mrf.mxu0
        %v2029 = vadd.f32 %v1964, %v2028
        %2030 = vmatmul.f32.gmra.mxu0 %v1365
        %v2031 = vpop.f32.mrf.mxu0
        %v2032 = vadd.f32 %v1967, %v2031
        %2033 = vmatmul.f32.gmra.mxu0 %v1366
        %v2034 = vpop.f32.mrf.mxu0
        %v2035 = vadd.f32 %v1970, %v2034
        %2036 = vmatmul.f32.gmra.mxu0 %v1367
        %v2037 = vpop.f32.mrf.mxu0
        %v2038 = vadd.f32 %v1973, %v2037
        %2039 = vmatmul.f32.gmra.mxu0 %v1370
        %v2040 = vpop.f32.mrf.mxu0
        %v2041 = vadd.f32 %v1976, %v2040
        %2042 = vmatmul.f32.gmra.mxu0 %v1371
        %v2043 = vpop.f32.mrf.mxu0
        %v2044 = vadd.f32 %v1979, %v2043
        %2045 = vmatmul.f32.gmra.mxu0 %v1372
        %v2046 = vpop.f32.mrf.mxu0
        %v2047 = vadd.f32 %v1982, %v2046
        %2048 = vmatmul.f32.gmra.mxu0 %v1373
        %v2049 = vpop.f32.mrf.mxu0
        %v2050 = vadd.f32 %v1985, %v2049
        %2051 = vmatmul.f32.gmra.mxu0 %v1374
        %v2052 = vpop.f32.mrf.mxu0
        %v2053 = vadd.f32 %v1988, %v2052
        %2054 = vmatmul.f32.gmra.mxu0 %v1375
        %v2055 = vpop.f32.mrf.mxu0
        %v2056 = vadd.f32 %v1991, %v2055
        %2057 = vmatmul.f32.gmra.mxu0 %v1376
        %v2058 = vpop.f32.mrf.mxu0
        %v2059 = vadd.f32 %v1994, %v2058
        %2060 = vmatmul.f32.gmra.mxu0 %v1377
        %v2061 = vpop.f32.mrf.mxu0
        %v2062 = vadd.f32 %v1997, %v2061
        %2063 = vdwg.mxu0
        %2064 = vmatpush.msra.mxu0 %v1933
        %2065 = vmatpush.msra.mxu0 %v1932
        %2066 = vmatpush.msra.mxu0 %v1931
        %2067 = vmatpush.msra.mxu0 %v1930
        %2068 = vmatpush.msra.mxu0 %v1929
        %2069 = vmatpush.msra.mxu0 %v1928
        %2070 = vmatpush.msra.mxu0 %v1927
        %2071 = vmatpush.msra.mxu0 %v1926
        %2072 = vmatpush.msra.mxu0 %v1925
        %2073 = vmatpush.msra.mxu0 %v1924
        %2074 = vmatpush.msra.mxu0 %v1923
        %2075 = vmatpush.msra.mxu0 %v1922
        %2076 = vmatpush.msra.mxu0 %v1921
        %2077 = vmatpush.msra.mxu0 %v1920
        %2078 = vmatpush.msra.mxu0 %v1919
        %2079 = vmatpush.msra.mxu0 %v1918
        %2080 = vmatmul.f32.gmra.mxu0 %v1380
        %v2081 = vpop.f32.mrf.mxu0
        %v2082 = vadd.f32 %v2017, %v2081
        %2083 = vmatmul.f32.gmra.mxu0 %v1381
        %v2084 = vpop.f32.mrf.mxu0
        %v2085 = vadd.f32 %v2020, %v2084
        %2086 = vmatmul.f32.gmra.mxu0 %v1382
        %v2087 = vpop.f32.mrf.mxu0
        %v2088 = vadd.f32 %v2023, %v2087
        %2089 = vmatmul.f32.gmra.mxu0 %v1383
        %v2090 = vpop.f32.mrf.mxu0
        %v2091 = vadd.f32 %v2026, %v2090
        %2092 = vmatmul.f32.gmra.mxu0 %v1384
        %v2093 = vpop.f32.mrf.mxu0
        %v2094 = vadd.f32 %v2029, %v2093
        %2095 = vmatmul.f32.gmra.mxu0 %v1385
        %v2096 = vpop.f32.mrf.mxu0
        %v2097 = vadd.f32 %v2032, %v2096
        %2098 = vmatmul.f32.gmra.mxu0 %v1386
        %v2099 = vpop.f32.mrf.mxu0
        %v2100 = vadd.f32 %v2035, %v2099
        %2101 = vmatmul.f32.gmra.mxu0 %v1387
        %v2102 = vpop.f32.mrf.mxu0
        %v2103 = vadd.f32 %v2038, %v2102
        %2104 = vmatmul.f32.gmra.mxu0 %v1390
        %v2105 = vpop.f32.mrf.mxu0
        %v2106 = vadd.f32 %v2041, %v2105
        %2107 = vmatmul.f32.gmra.mxu0 %v1391
        %v2108 = vpop.f32.mrf.mxu0
        %v2109 = vadd.f32 %v2044, %v2108
        %2110 = vmatmul.f32.gmra.mxu0 %v1392
        %v2111 = vpop.f32.mrf.mxu0
        %v2112 = vadd.f32 %v2047, %v2111
        %2113 = vmatmul.f32.gmra.mxu0 %v1393
        %v2114 = vpop.f32.mrf.mxu0
        %v2115 = vadd.f32 %v2050, %v2114
        %2116 = vmatmul.f32.gmra.mxu0 %v1394
        %v2117 = vpop.f32.mrf.mxu0
        %v2118 = vadd.f32 %v2053, %v2117
        %2119 = vmatmul.f32.gmra.mxu0 %v1395
        %v2120 = vpop.f32.mrf.mxu0
        %v2121 = vadd.f32 %v2056, %v2120
        %2122 = vmatmul.f32.gmra.mxu0 %v1396
        %v2123 = vpop.f32.mrf.mxu0
        %v2124 = vadd.f32 %v2059, %v2123
        %2125 = vmatmul.f32.gmra.mxu0 %v1397
        %v2126 = vpop.f32.mrf.mxu0
        %v2127 = vadd.f32 %v2062, %v2126
        %2128 = vdwg.mxu0
        %v2129 = vadd.f32 %v1838, %v2082
        %v2130 = vadd.f32 %v1841, %v2085
        %v2131 = vadd.f32 %v1844, %v2088
        %v2132 = vadd.f32 %v1847, %v2091
        %v2133 = vadd.f32 %v1850, %v2094
        %v2134 = vadd.f32 %v1853, %v2097
        %v2135 = vadd.f32 %v1856, %v2100
        %v2136 = vadd.f32 %v1859, %v2103
        %v2137 = vadd.f32 %v1862, %v2106
        %v2138 = vadd.f32 %v1865, %v2109
        %v2139 = vadd.f32 %v1868, %v2112
        %v2140 = vadd.f32 %v1871, %v2115
        %v2141 = vadd.f32 %v1874, %v2118
        %v2142 = vadd.f32 %v1877, %v2121
        %v2143 = vadd.f32 %v1880, %v2124
        %v2144 = vadd.f32 %v1883, %v2127
        %v2145 = vld [vmem:[%s5] sm:$0x1]
        %v2147 = vperm.slane %v2145, 0
        %v2149 = vmul.f32 %v2129, %v2147
        %v2150 = vmul.f32 %v2130, %v2147
        %v2151 = vmul.f32 %v2131, %v2147
        %v2152 = vmul.f32 %v2132, %v2147
        %v2153 = vmul.f32 %v2133, %v2147
        %v2154 = vmul.f32 %v2134, %v2147
        %v2155 = vmul.f32 %v2135, %v2147
        %v2156 = vmul.f32 %v2136, %v2147
        %v2157 = vmul.f32 %v2137, %v2147
        %v2158 = vmul.f32 %v2138, %v2147
        %v2159 = vmul.f32 %v2139, %v2147
        %v2160 = vmul.f32 %v2140, %v2147
        %v2161 = vmul.f32 %v2141, %v2147
        %v2162 = vmul.f32 %v2142, %v2147
        %v2163 = vmul.f32 %v2143, %v2147
        %v2164 = vmul.f32 %v2144, %v2147
        %v2165 = vld [vmem:[%s6] sm:$0x1]
        %v2167 = vperm.slane %v2165, 0
        %v2169 = vadd.f32 %v2149, %v2167
        %v2170 = vadd.f32 %v2150, %v2167
        %v2171 = vadd.f32 %v2151, %v2167
        %v2172 = vadd.f32 %v2152, %v2167
        %v2173 = vadd.f32 %v2153, %v2167
        %v2174 = vadd.f32 %v2154, %v2167
        %v2175 = vadd.f32 %v2155, %v2167
        %v2176 = vadd.f32 %v2156, %v2167
        %v2177 = vadd.f32 %v2157, %v2167
        %v2178 = vadd.f32 %v2158, %v2167
        %v2179 = vadd.f32 %v2159, %v2167
        %v2180 = vadd.f32 %v2160, %v2167
        %v2181 = vadd.f32 %v2161, %v2167
        %v2182 = vadd.f32 %v2162, %v2167
        %v2183 = vadd.f32 %v2163, %v2167
        %v2184 = vadd.f32 %v2164, %v2167
        %v2185 = vadd.f32 %v2169, %v335
        %v2186 = vadd.f32 %v2170, %v336
        %v2187 = vadd.f32 %v2171, %v337
        %v2188 = vadd.f32 %v2172, %v338
        %v2189 = vadd.f32 %v2173, %v339
        %v2190 = vadd.f32 %v2174, %v340
        %v2191 = vadd.f32 %v2175, %v341
        %v2192 = vadd.f32 %v2176, %v342
        %v2193 = vadd.f32 %v2177, %v343
        %v2194 = vadd.f32 %v2178, %v344
        %v2195 = vadd.f32 %v2179, %v345
        %v2196 = vadd.f32 %v2180, %v346
        %v2197 = vadd.f32 %v2181, %v347
        %v2198 = vadd.f32 %v2182, %v348
        %v2199 = vadd.f32 %v2183, %v349
        %v2200 = vadd.f32 %v2184, %v350
        %v2201 = vmax.f32 %v2185, 0.0
        %v2202 = vmax.f32 %v2186, 0.0
        %v2203 = vmax.f32 %v2187, 0.0
        %v2204 = vmax.f32 %v2188, 0.0
        %v2205 = vmax.f32 %v2189, 0.0
        %v2206 = vmax.f32 %v2190, 0.0
        %v2207 = vmax.f32 %v2191, 0.0
        %v2208 = vmax.f32 %v2192, 0.0
        %v2209 = vmax.f32 %v2193, 0.0
        %v2210 = vmax.f32 %v2194, 0.0
        %v2211 = vmax.f32 %v2195, 0.0
        %v2212 = vmax.f32 %v2196, 0.0
        %v2213 = vmax.f32 %v2197, 0.0
        %v2214 = vmax.f32 %v2198, 0.0
        %v2215 = vmax.f32 %v2199, 0.0
        %v2216 = vmax.f32 %v2200, 0.0
        %2217 = vst [vmem:[%s332] sm:$0xff] %v2201
        %2218 = vst [vmem:[%s332 + $0x8] sm:$0xff] %v2202
        %2219 = vst [vmem:[%s332 + $0x10] sm:$0xff] %v2203
        %2220 = vst [vmem:[%s332 + $0x18] sm:$0xff] %v2204
        %2221 = vst [vmem:[%s332 + $0x20] sm:$0xff] %v2205
        %2222 = vst [vmem:[%s332 + $0x28] sm:$0xff] %v2206
        %2223 = vst [vmem:[%s332 + $0x30] sm:$0xff] %v2207
        %2224 = vst [vmem:[%s332 + $0x38] sm:$0xff] %v2208
        %2225 = vst [vmem:[%s332 + $0x40] sm:$0xff] %v2209
        %2226 = vst [vmem:[%s332 + $0x48] sm:$0xff] %v2210
        %2227 = vst [vmem:[%s332 + $0x50] sm:$0xff] %v2211
        %2228 = vst [vmem:[%s332 + $0x58] sm:$0xff] %v2212
        %2229 = vst [vmem:[%s332 + $0x60] sm:$0xff] %v2213
        %2230 = vst [vmem:[%s332 + $0x68] sm:$0xff] %v2214
        %2231 = vst [vmem:[%s332 + $0x70] sm:$0xff] %v2215
        %2232 = vst [vmem:[%s332 + $0x78] sm:$0xff] %v2216
        %s2233 = sand.u32 %s185, 1
        %s2234 = scalar_lea.sflag [#allocation6], %s2233
        %s2235 = sand.u32 %s185, 1
        %s2236 = smul.addr %s2235, 128
        %s2237 = scalar_lea.vmem [#allocation10], %s2236
        // Predicated region
        $region61: #{tpu_custom_call.1} parent=47 // pred_check
          %p2238 = pneg %p195
        $region62: #{tpu_custom_call.1} parent=47 // pred_check_branch
          %2240 = sbr.rel (%p2238) target = $region64
        $region63: #{tpu_custom_call.1} parent=47 // pred_region
          %s2241 = smul.u32 2, %s25
          %2243 = vsyncadd %s2234, 0
          %s2244 = smul.addr %s2241, 8
          %s2245 = smul.addr %s2244, 8
          %s2246 = scalar_lea.hbm %s7, %s2245
          %s2247 = sshll.u32 %s2237, 4
          %s2248 = int_to_ptr.vmem [resolvable:$true] %s2247
          %s2249 = sshll.u32 %s2246, 4
          %s2250 = int_to_ptr.hbm [resolvable:$true] %s2249
          %2255 = dma.vmem_to_hbm [thread:$0]  %s2248, 2048, %s2250, %s2234, 128, 128, 8
        $region64: #{tpu_custom_call.1} parent=47 // pred_fallthru
          _
      $region48: #{tpu_custom_call.1} parent=5 // pred_fallthru
        _
      %p2256 = scmp.le.s32.totalorder 2, %s20
      // Predicated region
      $region65: #{tpu_custom_call.1} parent=5 // pred_check
        %p2257 = pneg %p2256
      $region66: #{tpu_custom_call.1} parent=5 // pred_check_branch
        %2259 = sbr.rel (%p2257) target = $region68
      $region67: #{tpu_custom_call.1} parent=5 // pred_region
        %s2260 = ssub.s32 %s20, 2
        // Predicated region
        $region69: #{tpu_custom_call.1} parent=67 // pred_check
          %p2261 = pneg %p201
        $region70: #{tpu_custom_call.1} parent=67 // pred_check_branch
          %2263 = sbr.rel (%p2261) target = $region72
        $region71: #{tpu_custom_call.1} parent=67 // pred_region
          %s2264 = sand.u32 %s186, 1
          %s2265 = scalar_lea.sflag [#allocation6], %s2264
          %s2266 = sand.u32 %s186, 1
          %s2267 = smul.addr %s2266, 128
          %s2268 = scalar_lea.vmem [#allocation10], %s2267
          %2270 = dma.done %s2265, 2048
        $region72: #{tpu_custom_call.1} parent=67 // pred_fallthru
          _
      $region68: #{tpu_custom_call.1} parent=5 // pred_fallthru
        _
    $region6: #{tpu_custom_call.1} parent=1 // loop_footer
      %s24 = sadd.s32 1, %s20
    $region7: #{tpu_custom_call.1} parent=1 // loop_footer_branch
      %19 = sbr.rel target = $region3
    $region8: #{tpu_custom_call.1} parent=1 // loop_exit
      _
    %2271 = vsyncpa [#allocation5], 1
    %s2272 = scalar_lea.sflag [#allocation5], 1
    %2273 = vsyncpa %s2272, 1
    %2274 = vsyncpa [#allocation8], 1
    %2275 = vsyncpa [#allocation6], 1
    %s2276 = scalar_lea.sflag [#allocation6], 1
    %2277 = vsyncpa %s2276, 1

</llo_original>
